<compile_context>
chip_gen: v7x
topology: tpu7x:2x2x1
jax: 0.10.0
libtpu: 0.0.40
codegen_flags: <defaults>
</compile_context>

<pallas_src>
import functools

import jax
import jax.numpy as jnp
from jax.experimental import pallas as pl
from jax.experimental.pallas import tpu as pltpu


def _round_up(x, m):
    return ((x + m - 1) // m) * m


def _textcnn_kernel(emb_ref, w_ref, p_ref, out_ref, *,
                    filter_sizes, nfp, seq_len, seq_pad):
    """Fused conv(+bias)+ReLU+masked-max-over-time+fc.

    emb_ref : [block_b * S, E]    compute dtype, batch-flattened embeddings
    w_ref   : [E, n_taps * nfp]   compute dtype, all conv taps, 128-lane padded
    p_ref   : [8 + Sp + Cp + 8, Wp] f32 params slab:
                rows [0, 8)           row 0 = conv bias           [Cp]
                rows [8, 8+Sp)        0/1 time-validity mask      [S, Cp]
                rows [8+Sp, 8+Sp+Cp)  fc weight                   [Cp, Op]
                rows [8+Sp+Cp, +8)    row 0 = fc bias             [Op]
    out_ref : [block_b, Op] f32
    """
    S = seq_len
    Sp = seq_pad
    nb = len(filter_sizes)
    Cp = nb * nfp
    rows = emb_ref.shape[0]
    bblk = rows // S
    Op = out_ref.shape[1]

    # --- one fused MXU matmul for every tap of every conv branch -------------
    # Note: K = E only partially fills the MXU contraction depth; that's fine,
    # the kernel is memory-bound (see review item on im2col if E ever grows).
    x = emb_ref[...]                                         # [rows, E]
    w = w_ref[...]                                           # [E, T*nfp]
    y = jnp.dot(x, w, preferred_element_type=jnp.float32)    # [rows, T*nfp] f32

    # --- realize each conv as shifted adds over 128-lane-aligned tap blocks --
    parts = []
    tap_base = 0
    for fs in filter_sizes:
        a = y[:, tap_base * nfp:(tap_base + 1) * nfp]        # tap k = 0
        for k in range(1, fs):
            tap = y[:, (tap_base + k) * nfp:(tap_base + k + 1) * nfp]
            # a[t] += tap[t + k].  Rows that wrap (or cross into the next
            # sequence inside the block) are invalid conv positions and are
            # zeroed by the time mask below (safe: post-ReLU values >= 0).
            a = a + jnp.roll(tap, -k, axis=0)
        parts.append(a)
        tap_base += fs
    acc = jnp.concatenate(parts, axis=1)                     # [rows, Cp]

    # --- bias + ReLU (f32 elementwise) ---------------------------------------
    conv_b = p_ref[0:1, 0:Cp]                                # [1, Cp]
    acc = jnp.maximum(acc + conv_b, 0.0)

    # --- pre-baked time mask + max over time (2-D ops only) -------------------
    mask = p_ref[8:8 + S, 0:Cp]                              # [S, Cp] 0/1
    pooled_rows = []
    for b in range(bblk):
        blk = acc[b * S:(b + 1) * S, :] * mask               # [S, Cp]
        pooled_rows.append(jnp.max(blk, axis=0, keepdims=True))
    pooled = jnp.concatenate(pooled_rows, axis=0)            # [bblk, Cp]

    # TODO(synk): dropout is identity in eval/inference mode; training-mode
    # dropout (stochastic mask) is not implemented here.

    # --- fully connected layer (f32) ------------------------------------------
    fcw = p_ref[8 + Sp:8 + Sp + Cp, 0:Op]                    # [Cp, Op]
    fcb = p_ref[8 + Sp + Cp:8 + Sp + Cp + 1, 0:Op]           # [1, Op]
    out = jnp.dot(pooled, fcw, preferred_element_type=jnp.float32) + fcb
    out_ref[...] = out.astype(out_ref.dtype)


def textcnn_forward(emb_table, text, conv_ws, conv_bs, fc_w, fc_b, *,
                    compute_dtype=jnp.bfloat16, block_b=None):
    """emb_table: [V, E] f32; text: [B, S] int32 token ids;
       conv_ws[i]: [fs_i, E, nf]; conv_bs[i]: [1, nf];
       fc_w: [3*nf, O] (torch W^T); fc_b: [1, O].
       compute_dtype: dtype of the MXU matmul operands (bf16 default)."""
    B, S = text.shape
    V, E = emb_table.shape
    nf = conv_ws[0].shape[2]
    filter_sizes = tuple(int(w.shape[0]) for w in conv_ws)
    nb = len(filter_sizes)
    T = sum(filter_sizes)
    O = fc_w.shape[1]

    # --- tile-aligned sizes ---------------------------------------------------
    nfp = _round_up(nf, 128)        # per-tap lane width -> whole vregs
    Cp = nb * nfp                   # concat feature width inside the kernel
    Op = _round_up(O, 128)          # lane-dense output width
    Wp = max(Cp, Op)                # params slab width
    Sp = _round_up(S, 8)            # mask block rows (sublane aligned)

    # --- block size: >=512 flattened rows per step; >=2 steps when possible --
    if block_b is None:
        block_b = _round_up(max(1, -(-512 // S)), 8)          # ~512 rows/step
        half_batch = _round_up(max(1, -(-B // 2)), 8)         # >=2 grid steps (v7x)
        block_b = max(8, min(block_b, half_batch))
    Bp = _round_up(B, block_b)

    # --- embedding gather fused with pad + dtype cast (single HBM pass) ------
    # Pad the token ids (cheap) instead of the gathered activations, and cast
    # the tiny table once so the gather writes compute_dtype directly.
    # TODO(synk): full in-kernel gather (scalar-prefetched ids + DMA row
    # gather) would remove this HBM round trip entirely.
    text_p = jnp.pad(text, ((0, Bp - B), (0, 0)))
    emb2d = jnp.take(emb_table.astype(compute_dtype),
                     text_p.reshape(-1), axis=0)              # [Bp*S, E]

    # --- all conv taps side by side, each padded to a 128-lane block ---------
    taps = []
    for i in range(nb):
        for k in range(filter_sizes[i]):
            taps.append(jnp.pad(conv_ws[i][k], ((0, 0), (0, nfp - nf))))
    w_all = jnp.concatenate(taps, axis=1).astype(compute_dtype)   # [E, T*nfp]

    # --- params slab (f32), every block 8-row (sublane) aligned --------------
    bias_blk = jnp.zeros((8, Wp), jnp.float32)
    for i in range(nb):
        bias_blk = bias_blk.at[0, i * nfp:i * nfp + nf].set(conv_bs[i][0])

    t_idx = jnp.arange(Sp, dtype=jnp.int32)[:, None]
    mask_cols = []
    for fs in filter_sizes:
        valid = (t_idx < (S - fs + 1)).astype(jnp.float32)    # [Sp, 1]
        mask_cols.append(jnp.broadcast_to(valid, (Sp, nfp)))
    mask_blk = jnp.concatenate(mask_cols, axis=1)             # [Sp, Cp]
    mask_blk = jnp.pad(mask_blk, ((0, 0), (0, Wp - Cp)))

    fcw_blk = jnp.zeros((Cp, Wp), jnp.float32)
    for i in range(nb):
        fcw_blk = fcw_blk.at[i * nfp:i * nfp + nf, :O].set(
            fc_w[i * nf:(i + 1) * nf, :])

    fcb_blk = jnp.zeros((8, Wp), jnp.float32).at[0, :O].set(fc_b[0])

    params = jnp.concatenate([bias_blk, mask_blk, fcw_blk, fcb_blk], axis=0)
    slab_rows = params.shape[0]                               # 8 + Sp + Cp + 8

    kernel = functools.partial(
        _textcnn_kernel,
        filter_sizes=filter_sizes, nfp=nfp, seq_len=S, seq_pad=Sp)

    # --- explicit VMEM budget (v5e default scoped cap 16 MiB; v7x 64 MiB) ----
    dsz = jnp.dtype(compute_dtype).itemsize
    est = (2 * block_b * S * E * dsz              # emb block, double-buffered
           + 2 * E * T * nfp * dsz                # W_all (resident)
           + 2 * slab_rows * Wp * 4               # params slab
           + 2 * block_b * Op * 4                 # output block
           + 8 * block_b * S * T * nfp * 4)       # y + temporaries headroom
    vmem_limit = int(min(est + (16 << 20), 56 << 20))

    out_p = pl.pallas_call(
        kernel,
        out_shape=jax.ShapeDtypeStruct((Bp, Op), jnp.float32),
        grid_spec=pltpu.PrefetchScalarGridSpec(
            num_scalar_prefetch=0,
            grid=(Bp // block_b,),
            in_specs=[
                pl.BlockSpec((block_b * S, E), lambda i: (i, 0)),
                pl.BlockSpec((E, T * nfp), lambda i: (0, 0)),
                pl.BlockSpec((slab_rows, Wp), lambda i: (0, 0)),
            ],
            out_specs=pl.BlockSpec((block_b, Op), lambda i: (i, 0)),
        ),
        compiler_params=pltpu.CompilerParams(
            dimension_semantics=("parallel",),
            vmem_limit_bytes=vmem_limit),
    )(emb2d, w_all, params)

    return out_p[:B, :O]


def reference_forward(emb, conv_ws, conv_bs, fc_w, fc_b):
    """Pure-JAX f32 reference mirroring the PyTorch forward (eval mode)."""
    pooled = []
    S = emb.shape[1]
    for w, b in zip(conv_ws, conv_bs):
        fs = w.shape[0]
        L = S - fs + 1
        acc = sum(jnp.einsum('ble,ef->blf', emb[:, k:k + L, :], w[k],
                             precision='highest')
                  for k in range(fs)) + b[None, :, :]
        pooled.append(jnp.max(jax.nn.relu(acc), axis=1))
    cat = jnp.concatenate(pooled, axis=1)
    return jnp.dot(cat, fc_w, precision='highest') + fc_b


if __name__ == "__main__":
    # Small shapes consistent with the module
    vocab_size = 100
    embedding_dim = 32
    n_filters = 8
    filter_sizes = (3, 4, 5)
    output_dim = 4
    pad_idx = 0
    batch = 2
    seq_len = 16

    key = jax.random.PRNGKey(0)
    k_emb, k_tok, kw0, kw1, kw2, kb0, kb1, kb2, kfw, kfb = jax.random.split(key, 10)

    # Embedding table (padding_idx row zeroed, as nn.Embedding does)
    emb_table = jax.random.normal(k_emb, (vocab_size, embedding_dim), jnp.float32) * 0.1
    emb_table = emb_table.at[pad_idx].set(0.0)

    # Token ids [B, S]
    text = jax.random.randint(k_tok, (batch, seq_len), 0, vocab_size, jnp.int32)

    # Conv weights: torch shape is [F, 1, fs, E]; stored here as [fs, E, F]
    conv_ws = [
        jax.random.normal(kw0, (filter_sizes[0], embedding_dim, n_filters), jnp.float32) * 0.1,
        jax.random.normal(kw1, (filter_sizes[1], embedding_dim, n_filters), jnp.float32) * 0.1,
        jax.random.normal(kw2, (filter_sizes[2], embedding_dim, n_filters), jnp.float32) * 0.1,
    ]
    conv_bs = [
        jax.random.normal(kb0, (1, n_filters), jnp.float32) * 0.1,
        jax.random.normal(kb1, (1, n_filters), jnp.float32) * 0.1,
        jax.random.normal(kb2, (1, n_filters), jnp.float32) * 0.1,
    ]

    # FC: torch Linear(3F -> O); stored as [3F, O] (= W^T) plus bias [1, O]
    fc_w = jax.random.normal(kfw, (len(filter_sizes) * n_filters, output_dim), jnp.float32) * 0.1
    fc_b = jax.random.normal(kfb, (1, output_dim), jnp.float32) * 0.1

    # Pure-JAX reference (embedding gather + conv + pool + fc)
    embedded = jnp.take(emb_table, text, axis=0)              # [B, S, E]
    ref = reference_forward(embedded, conv_ws, conv_bs, fc_w, fc_b)

    # Default path: bf16 MXU operands (v5e/v6e/v7x-native), f32 accumulation
    out_bf16 = textcnn_forward(emb_table, text, conv_ws, conv_bs, fc_w, fc_b)
    out_bf16 = jax.block_until_ready(out_bf16)
    assert out_bf16.shape == (batch, output_dim)
    assert jnp.allclose(out_bf16, ref, atol=2e-2, rtol=2e-2)

    # f32 matmul operands: tighter check
    out_f32 = textcnn_forward(emb_table, text, conv_ws, conv_bs, fc_w, fc_b,
                              compute_dtype=jnp.float32)
    out_f32 = jax.block_until_ready(out_f32)
    assert out_f32.shape == (batch, output_dim)
    assert jnp.allclose(out_f32, ref, atol=5e-3, rtol=5e-3)

    print("KERNEL_OK")
</pallas_src>

<mosaic_0001>
module attributes {stable_mosaic.version = 11 : i64} {
  func.func @_textcnn_kernel(%arg0: i32, %arg1: memref<128x32xbf16, #tpu.memory_space<vmem>>, %arg2: memref<32x1536xbf16, #tpu.memory_space<vmem>>, %arg3: memref<416x384xf32, #tpu.memory_space<vmem>>, %arg4: memref<8x128xf32, #tpu.memory_space<vmem>>) attributes {dimension_semantics = [#tpu.dimension_semantics<parallel>], iteration_bounds = array<i64: 1>, scalar_prefetch = 0 : i64, scratch_operands = 0 : i64, tpu.core_type = #tpu.core_type<tc>, window_params = [{transform_indices = @transform_0, window_bounds = array<i64: 128, 32>}, {pipeline_mode = #tpu.pipeline_mode<synchronous>, transform_indices = @transform_1, window_bounds = array<i64: 32, 1536>}, {pipeline_mode = #tpu.pipeline_mode<synchronous>, transform_indices = @transform_2, window_bounds = array<i64: 416, 384>}, {transform_indices = @transform_3, window_bounds = array<i64: 8, 128>}]} {
    %c0 = arith.constant 0 : index
    %c0_0 = arith.constant 0 : index
    %0 = vector.load %arg1[%c0, %c0_0] : memref<128x32xbf16, #tpu.memory_space<vmem>>, vector<128x32xbf16>
    %c0_1 = arith.constant 0 : index
    %c0_2 = arith.constant 0 : index
    %1 = vector.load %arg2[%c0_1, %c0_2] : memref<32x1536xbf16, #tpu.memory_space<vmem>>, vector<32x1536xbf16>
    %cst = arith.constant dense<0.000000e+00> : vector<128x1536xf32>
    %2 = tpu.matmul %0, %1, %cst {dimension_numbers = #tpu.dot_dimension_numbers<[1], [0], [0], [1], [0, 0, 1, 1], [], []>} : vector<128x32xbf16>, vector<32x1536xbf16>, vector<128x1536xf32> -> vector<128x1536xf32>
    %3 = vector.extract_strided_slice %2 {offsets = [0, 0], sizes = [128, 128], strides = [1, 1]} : vector<128x1536xf32> to vector<128x128xf32>
    %4 = vector.extract_strided_slice %2 {offsets = [0, 128], sizes = [128, 128], strides = [1, 1]} : vector<128x1536xf32> to vector<128x128xf32>
    %5 = vector.extract_strided_slice %4 {offsets = [1, 0], sizes = [127, 128], strides = [1, 1]} : vector<128x128xf32> to vector<127x128xf32>
    %6 = vector.extract_strided_slice %4 {offsets = [0, 0], sizes = [1, 128], strides = [1, 1]} : vector<128x128xf32> to vector<1x128xf32>
    %7 = tpu.concatenate %5, %6 in 0 : vector<127x128xf32>, vector<1x128xf32> -> vector<128x128xf32>
    %8 = arith.addf %3, %7 : vector<128x128xf32>
    %9 = vector.extract_strided_slice %2 {offsets = [0, 256], sizes = [128, 128], strides = [1, 1]} : vector<128x1536xf32> to vector<128x128xf32>
    %10 = vector.extract_strided_slice %9 {offsets = [2, 0], sizes = [126, 128], strides = [1, 1]} : vector<128x128xf32> to vector<126x128xf32>
    %11 = vector.extract_strided_slice %9 {offsets = [0, 0], sizes = [2, 128], strides = [1, 1]} : vector<128x128xf32> to vector<2x128xf32>
    %12 = tpu.concatenate %10, %11 in 0 : vector<126x128xf32>, vector<2x128xf32> -> vector<128x128xf32>
    %13 = arith.addf %8, %12 : vector<128x128xf32>
    %14 = vector.extract_strided_slice %2 {offsets = [0, 384], sizes = [128, 128], strides = [1, 1]} : vector<128x1536xf32> to vector<128x128xf32>
    %15 = vector.extract_strided_slice %2 {offsets = [0, 512], sizes = [128, 128], strides = [1, 1]} : vector<128x1536xf32> to vector<128x128xf32>
    %16 = vector.extract_strided_slice %15 {offsets = [1, 0], sizes = [127, 128], strides = [1, 1]} : vector<128x128xf32> to vector<127x128xf32>
    %17 = vector.extract_strided_slice %15 {offsets = [0, 0], sizes = [1, 128], strides = [1, 1]} : vector<128x128xf32> to vector<1x128xf32>
    %18 = tpu.concatenate %16, %17 in 0 : vector<127x128xf32>, vector<1x128xf32> -> vector<128x128xf32>
    %19 = arith.addf %14, %18 : vector<128x128xf32>
    %20 = vector.extract_strided_slice %2 {offsets = [0, 640], sizes = [128, 128], strides = [1, 1]} : vector<128x1536xf32> to vector<128x128xf32>
    %21 = vector.extract_strided_slice %20 {offsets = [2, 0], sizes = [126, 128], strides = [1, 1]} : vector<128x128xf32> to vector<126x128xf32>
    %22 = vector.extract_strided_slice %20 {offsets = [0, 0], sizes = [2, 128], strides = [1, 1]} : vector<128x128xf32> to vector<2x128xf32>
    %23 = tpu.concatenate %21, %22 in 0 : vector<126x128xf32>, vector<2x128xf32> -> vector<128x128xf32>
    %24 = arith.addf %19, %23 : vector<128x128xf32>
    %25 = vector.extract_strided_slice %2 {offsets = [0, 768], sizes = [128, 128], strides = [1, 1]} : vector<128x1536xf32> to vector<128x128xf32>
    %26 = vector.extract_strided_slice %25 {offsets = [3, 0], sizes = [125, 128], strides = [1, 1]} : vector<128x128xf32> to vector<125x128xf32>
    %27 = vector.extract_strided_slice %25 {offsets = [0, 0], sizes = [3, 128], strides = [1, 1]} : vector<128x128xf32> to vector<3x128xf32>
    %28 = tpu.concatenate %26, %27 in 0 : vector<125x128xf32>, vector<3x128xf32> -> vector<128x128xf32>
    %29 = arith.addf %24, %28 : vector<128x128xf32>
    %30 = vector.extract_strided_slice %2 {offsets = [0, 896], sizes = [128, 128], strides = [1, 1]} : vector<128x1536xf32> to vector<128x128xf32>
    %31 = vector.extract_strided_slice %2 {offsets = [0, 1024], sizes = [128, 128], strides = [1, 1]} : vector<128x1536xf32> to vector<128x128xf32>
    %32 = vector.extract_strided_slice %31 {offsets = [1, 0], sizes = [127, 128], strides = [1, 1]} : vector<128x128xf32> to vector<127x128xf32>
    %33 = vector.extract_strided_slice %31 {offsets = [0, 0], sizes = [1, 128], strides = [1, 1]} : vector<128x128xf32> to vector<1x128xf32>
    %34 = tpu.concatenate %32, %33 in 0 : vector<127x128xf32>, vector<1x128xf32> -> vector<128x128xf32>
    %35 = arith.addf %30, %34 : vector<128x128xf32>
    %36 = vector.extract_strided_slice %2 {offsets = [0, 1152], sizes = [128, 128], strides = [1, 1]} : vector<128x1536xf32> to vector<128x128xf32>
    %37 = vector.extract_strided_slice %36 {offsets = [2, 0], sizes = [126, 128], strides = [1, 1]} : vector<128x128xf32> to vector<126x128xf32>
    %38 = vector.extract_strided_slice %36 {offsets = [0, 0], sizes = [2, 128], strides = [1, 1]} : vector<128x128xf32> to vector<2x128xf32>
    %39 = tpu.concatenate %37, %38 in 0 : vector<126x128xf32>, vector<2x128xf32> -> vector<128x128xf32>
    %40 = arith.addf %35, %39 : vector<128x128xf32>
    %41 = vector.extract_strided_slice %2 {offsets = [0, 1280], sizes = [128, 128], strides = [1, 1]} : vector<128x1536xf32> to vector<128x128xf32>
    %42 = vector.extract_strided_slice %41 {offsets = [3, 0], sizes = [125, 128], strides = [1, 1]} : vector<128x128xf32> to vector<125x128xf32>
    %43 = vector.extract_strided_slice %41 {offsets = [0, 0], sizes = [3, 128], strides = [1, 1]} : vector<128x128xf32> to vector<3x128xf32>
    %44 = tpu.concatenate %42, %43 in 0 : vector<125x128xf32>, vector<3x128xf32> -> vector<128x128xf32>
    %45 = arith.addf %40, %44 : vector<128x128xf32>
    %46 = vector.extract_strided_slice %2 {offsets = [0, 1408], sizes = [128, 128], strides = [1, 1]} : vector<128x1536xf32> to vector<128x128xf32>
    %47 = vector.extract_strided_slice %46 {offsets = [4, 0], sizes = [124, 128], strides = [1, 1]} : vector<128x128xf32> to vector<124x128xf32>
    %48 = vector.extract_strided_slice %46 {offsets = [0, 0], sizes = [4, 128], strides = [1, 1]} : vector<128x128xf32> to vector<4x128xf32>
    %49 = tpu.concatenate %47, %48 in 0 : vector<124x128xf32>, vector<4x128xf32> -> vector<128x128xf32>
    %50 = arith.addf %45, %49 : vector<128x128xf32>
    %51 = tpu.concatenate %13, %29, %50 in 1 : vector<128x128xf32>, vector<128x128xf32>, vector<128x128xf32> -> vector<128x384xf32>
    %c0_3 = arith.constant 0 : index
    %c0_4 = arith.constant 0 : index
    %52 = vector.load %arg3[%c0_3, %c0_4] : memref<416x384xf32, #tpu.memory_space<vmem>>, vector<1x384xf32>
    %53 = vector.broadcast %52 : vector<1x384xf32> to vector<128x384xf32>
    %54 = arith.addf %51, %53 : vector<128x384xf32>
    %cst_5 = arith.constant 0.000000e+00 : f32
    %55 = vector.broadcast %cst_5 : f32 to vector<128x384xf32>
    %56 = arith.maximumf %54, %55 : vector<128x384xf32>
    %c8 = arith.constant 8 : index
    %c0_6 = arith.constant 0 : index
    %57 = vector.load %arg3[%c8, %c0_6] : memref<416x384xf32, #tpu.memory_space<vmem>>, vector<16x384xf32>
    %58 = vector.extract_strided_slice %56 {offsets = [0, 0], sizes = [16, 384], strides = [1, 1]} : vector<128x384xf32> to vector<16x384xf32>
    %59 = arith.mulf %58, %57 : vector<16x384xf32>
    %cst_7 = arith.constant dense<0xFF800000> : vector<384xf32>
    %60 = vector.multi_reduction <maximumf>, %59, %cst_7 [0] : vector<16x384xf32> to vector<384xf32>
    %61 = vector.shape_cast %60 : vector<384xf32> to vector<1x384xf32>
    %62 = vector.extract_strided_slice %56 {offsets = [16, 0], sizes = [16, 384], strides = [1, 1]} : vector<128x384xf32> to vector<16x384xf32>
    %63 = arith.mulf %62, %57 : vector<16x384xf32>
    %cst_8 = arith.constant dense<0xFF800000> : vector<384xf32>
    %64 = vector.multi_reduction <maximumf>, %63, %cst_8 [0] : vector<16x384xf32> to vector<384xf32>
    %65 = vector.shape_cast %64 : vector<384xf32> to vector<1x384xf32>
    %66 = vector.extract_strided_slice %56 {offsets = [32, 0], sizes = [16, 384], strides = [1, 1]} : vector<128x384xf32> to vector<16x384xf32>
    %67 = arith.mulf %66, %57 : vector<16x384xf32>
    %cst_9 = arith.constant dense<0xFF800000> : vector<384xf32>
    %68 = vector.multi_reduction <maximumf>, %67, %cst_9 [0] : vector<16x384xf32> to vector<384xf32>
    %69 = vector.shape_cast %68 : vector<384xf32> to vector<1x384xf32>
    %70 = vector.extract_strided_slice %56 {offsets = [48, 0], sizes = [16, 384], strides = [1, 1]} : vector<128x384xf32> to vector<16x384xf32>
    %71 = arith.mulf %70, %57 : vector<16x384xf32>
    %cst_10 = arith.constant dense<0xFF800000> : vector<384xf32>
    %72 = vector.multi_reduction <maximumf>, %71, %cst_10 [0] : vector<16x384xf32> to vector<384xf32>
    %73 = vector.shape_cast %72 : vector<384xf32> to vector<1x384xf32>
    %74 = vector.extract_strided_slice %56 {offsets = [64, 0], sizes = [16, 384], strides = [1, 1]} : vector<128x384xf32> to vector<16x384xf32>
    %75 = arith.mulf %74, %57 : vector<16x384xf32>
    %cst_11 = arith.constant dense<0xFF800000> : vector<384xf32>
    %76 = vector.multi_reduction <maximumf>, %75, %cst_11 [0] : vector<16x384xf32> to vector<384xf32>
    %77 = vector.shape_cast %76 : vector<384xf32> to vector<1x384xf32>
    %78 = vector.extract_strided_slice %56 {offsets = [80, 0], sizes = [16, 384], strides = [1, 1]} : vector<128x384xf32> to vector<16x384xf32>
    %79 = arith.mulf %78, %57 : vector<16x384xf32>
    %cst_12 = arith.constant dense<0xFF800000> : vector<384xf32>
    %80 = vector.multi_reduction <maximumf>, %79, %cst_12 [0] : vector<16x384xf32> to vector<384xf32>
    %81 = vector.shape_cast %80 : vector<384xf32> to vector<1x384xf32>
    %82 = vector.extract_strided_slice %56 {offsets = [96, 0], sizes = [16, 384], strides = [1, 1]} : vector<128x384xf32> to vector<16x384xf32>
    %83 = arith.mulf %82, %57 : vector<16x384xf32>
    %cst_13 = arith.constant dense<0xFF800000> : vector<384xf32>
    %84 = vector.multi_reduction <maximumf>, %83, %cst_13 [0] : vector<16x384xf32> to vector<384xf32>
    %85 = vector.shape_cast %84 : vector<384xf32> to vector<1x384xf32>
    %86 = vector.extract_strided_slice %56 {offsets = [112, 0], sizes = [16, 384], strides = [1, 1]} : vector<128x384xf32> to vector<16x384xf32>
    %87 = arith.mulf %86, %57 : vector<16x384xf32>
    %cst_14 = arith.constant dense<0xFF800000> : vector<384xf32>
    %88 = vector.multi_reduction <maximumf>, %87, %cst_14 [0] : vector<16x384xf32> to vector<384xf32>
    %89 = vector.shape_cast %88 : vector<384xf32> to vector<1x384xf32>
    %90 = tpu.concatenate %61, %65, %69, %73, %77, %81, %85, %89 in 0 : vector<1x384xf32>, vector<1x384xf32>, vector<1x384xf32>, vector<1x384xf32>, vector<1x384xf32>, vector<1x384xf32>, vector<1x384xf32>, vector<1x384xf32> -> vector<8x384xf32>
    %c24 = arith.constant 24 : index
    %c0_15 = arith.constant 0 : index
    %91 = vector.load %arg3[%c24, %c0_15] : memref<416x384xf32, #tpu.memory_space<vmem>>, vector<384x128xf32>
    %c408 = arith.constant 408 : index
    %c0_16 = arith.constant 0 : index
    %92 = vector.load %arg3[%c408, %c0_16] : memref<416x384xf32, #tpu.memory_space<vmem>>, vector<1x128xf32>
    %cst_17 = arith.constant dense<0.000000e+00> : vector<8x128xf32>
    %93 = tpu.matmul %90, %91, %cst_17 {dimension_numbers = #tpu.dot_dimension_numbers<[1], [0], [0], [1], [0, 0, 1, 1], [], []>} : vector<8x384xf32>, vector<384x128xf32>, vector<8x128xf32> -> vector<8x128xf32>
    %94 = vector.broadcast %92 : vector<1x128xf32> to vector<8x128xf32>
    %95 = arith.addf %93, %94 : vector<8x128xf32>
    %c0_18 = arith.constant 0 : index
    %c0_19 = arith.constant 0 : index
    %96 = vector.load %arg4[%c0_18, %c0_19] : memref<8x128xf32, #tpu.memory_space<vmem>>, vector<8x128xf32>
    tpu.vector_store %arg4[%c0_18, %c0_19], %95 {strides = array<i32>} : memref<8x128xf32, #tpu.memory_space<vmem>>, vector<8x128xf32>,
    return
  }
  func.func @transform_0(%arg0: i32) -> (i32, i32) {
    %c0_i32 = arith.constant 0 : i32
    %c0_i32_0 = arith.constant 0 : i32
    return %arg0, %c0_i32 : i32, i32
  }
  func.func @transform_1(%arg0: i32) -> (i32, i32) {
    %c0_i32 = arith.constant 0 : i32
    %c0_i32_0 = arith.constant 0 : i32
    %c0_i32_1 = arith.constant 0 : i32
    return %c0_i32, %c0_i32_0 : i32, i32
  }
  func.func @transform_2(%arg0: i32) -> (i32, i32) {
    %c0_i32 = arith.constant 0 : i32
    %c0_i32_0 = arith.constant 0 : i32
    %c0_i32_1 = arith.constant 0 : i32
    return %c0_i32, %c0_i32_0 : i32, i32
  }
  func.func @transform_3(%arg0: i32) -> (i32, i32) {
    %c0_i32 = arith.constant 0 : i32
    %c0_i32_0 = arith.constant 0 : i32
    return %arg0, %c0_i32 : i32, i32
  }
}

</mosaic_0001>

<llo_original>
// kernel: tpu_custom_call.1
$region0: #{tpu_custom_call.1}
  #allocation0 [shape = 'u32[]', space=smem, size = 0x4, offset = 0x4, fixed_abs, tag = 'smem constant byte address 0x4 - core index']
  #allocation1 [shape = 'u32[144,128]{1,0:T(1,128)}', space=vmem, size = 0x12000, scoped, tag = 'internal scratch']
  %s0 = inlined_call_operand.vmem [shape: bf16[128,32], index: 0, kind: input, shape index: {}]
  %s1 = inlined_call_operand.hbm [shape: bf16[32,1536], index: 1, kind: input, shape index: {}]
  %s2 = inlined_call_operand.hbm [shape: f32[416,384], index: 2, kind: input, shape index: {}]
  %s3 = inlined_call_operand.hbm [shape: f32[8,128], index: 3, kind: output, shape index: {}]
  %s4 = sld [smem:[#allocation0]]
  $region30: #{tpu_custom_call.1} parent=0
    _
  %s6 = ssub.s32 1, %s4
  %s7 = scalar_select 0, %s6, %s4
  $region1: #{tpu_custom_call.1} parent=0
    #allocation2 [shape = 'u8[98304]{0}', space=vmem, size = 0x18000, scoped, tag = 'input window, operand 1, single buffered']
    #allocation3 [shape = 's32[1]{0}', space=sflag, size = 0x4, scoped, tag = 'scoped memory for tpu_custom_call.1']
    #allocation4 [shape = 's32[1]{0}', space=sflag, size = 0x4, scoped, tag = 'scoped memory for tpu_custom_call.1']
    #allocation5 [shape = 'u8[638976]{0}', space=vmem, size = 0x9c000, scoped, tag = 'input window, operand 2, single buffered']
    #allocation6 [shape = 's32[1]{0}', space=sflag, size = 0x4, scoped, tag = 'scoped memory for tpu_custom_call.1']
    #allocation7 [shape = 'u8[4096]{0}', space=vmem, size = 0x1000, scoped, tag = 'output window, operand 0, single buffered']
    %8 = vsyncpa [#allocation3], 0
    %9 = vsyncpa [#allocation6], 0
    %10 = vsyncpa [#allocation4], 0
    // Predicated region
    $region2: #{tpu_custom_call.1} parent=1 // pred_check
      _
    $region3: #{tpu_custom_call.1} parent=1 // pred_check_branch
      %12 = sbr.rel (0) target = $region5
    $region4: #{tpu_custom_call.1} parent=1 // pred_region
      _
    $region5: #{tpu_custom_call.1} parent=1 // pred_fallthru
      _
    // Predicated region
    $region6: #{tpu_custom_call.1} parent=1 // pred_check
      _
    $region7: #{tpu_custom_call.1} parent=1 // pred_check_branch
      %14 = sbr.rel (0) target = $region9
    $region8: #{tpu_custom_call.1} parent=1 // pred_region
      %s16 = ssub.s32 3072, 3072
      %17 = vsyncadd [#allocation3], %s16
      %s18 = sshll.u32 [#allocation2], 4
      %s19 = int_to_ptr.vmem [resolvable:$true] %s18
      %24 = dma.hbm_to_vmem [thread:$0]  %s1, 3072, %s19, [#allocation3], 768, 768, 48
    $region9: #{tpu_custom_call.1} parent=1 // pred_fallthru
      _
    // Predicated region
    $region10: #{tpu_custom_call.1} parent=1 // pred_check
      _
    $region11: #{tpu_custom_call.1} parent=1 // pred_check_branch
      %26 = sbr.rel (0) target = $region13
    $region12: #{tpu_custom_call.1} parent=1 // pred_region
      %s28 = ssub.s32 19968, 19968
      %29 = vsyncadd [#allocation6], %s28
      %s30 = sshll.u32 [#allocation5], 4
      %s31 = int_to_ptr.vmem [resolvable:$true] %s30
      %36 = dma.hbm_to_vmem [thread:$0]  %s2, 19968, %s31, [#allocation6], 384, 384, 24
    $region13: #{tpu_custom_call.1} parent=1 // pred_fallthru
      _
    // Predicated region
    $region14: #{tpu_custom_call.1} parent=1 // pred_check
      _
    $region15: #{tpu_custom_call.1} parent=1 // pred_check_branch
      %38 = sbr.rel (0) target = $region17
    $region16: #{tpu_custom_call.1} parent=1 // pred_region
      %39 = dma.done [#allocation3], 3072
    $region17: #{tpu_custom_call.1} parent=1 // pred_fallthru
      _
    // Predicated region
    $region18: #{tpu_custom_call.1} parent=1 // pred_check
      _
    $region19: #{tpu_custom_call.1} parent=1 // pred_check_branch
      %41 = sbr.rel (0) target = $region21
    $region20: #{tpu_custom_call.1} parent=1 // pred_region
      %42 = dma.done [#allocation6], 19968
    $region21: #{tpu_custom_call.1} parent=1 // pred_fallthru
      _
    %v44 = vld [vmem:[%s0] sm:$0xf]
    %v45 = vld [vmem:[%s0 + $0x4] sm:$0xf]
    %v46 = vld [vmem:[%s0 + $0x8] sm:$0xf]
    %v47 = vld [vmem:[%s0 + $0xc] sm:$0xf]
    %v48 = vld [vmem:[%s0 + $0x10] sm:$0xf]
    %v49 = vld [vmem:[%s0 + $0x14] sm:$0xf]
    %v50 = vld [vmem:[%s0 + $0x18] sm:$0xf]
    %v51 = vld [vmem:[%s0 + $0x1c] sm:$0xf]
    %v52 = vld [vmem:[%s0 + $0x20] sm:$0xf]
    %v53 = vld [vmem:[%s0 + $0x24] sm:$0xf]
    %v54 = vld [vmem:[%s0 + $0x28] sm:$0xf]
    %v55 = vld [vmem:[%s0 + $0x2c] sm:$0xf]
    %v56 = vld [vmem:[%s0 + $0x30] sm:$0xf]
    %v57 = vld [vmem:[%s0 + $0x34] sm:$0xf]
    %v58 = vld [vmem:[%s0 + $0x38] sm:$0xf]
    %v59 = vld [vmem:[%s0 + $0x3c] sm:$0xf]
    %v60 = vld [vmem:[#allocation2] sm:$0xff]
    %v61 = vld [vmem:[#allocation2 + $0x8] sm:$0xff]
    %v62 = vld [vmem:[#allocation2 + $0x10] sm:$0xff]
    %v63 = vld [vmem:[#allocation2 + $0x18] sm:$0xff]
    %v64 = vld [vmem:[#allocation2 + $0x20] sm:$0xff]
    %v65 = vld [vmem:[#allocation2 + $0x28] sm:$0xff]
    %v66 = vld [vmem:[#allocation2 + $0x30] sm:$0xff]
    %v67 = vld [vmem:[#allocation2 + $0x38] sm:$0xff]
    %v68 = vld [vmem:[#allocation2 + $0x40] sm:$0xff]
    %v69 = vld [vmem:[#allocation2 + $0x48] sm:$0xff]
    %v70 = vld [vmem:[#allocation2 + $0x50] sm:$0xff]
    %v71 = vld [vmem:[#allocation2 + $0x58] sm:$0xff]
    %v72 = vld [vmem:[#allocation2 + $0x60] sm:$0xff]
    %v73 = vld [vmem:[#allocation2 + $0x68] sm:$0xff]
    %v74 = vld [vmem:[#allocation2 + $0x70] sm:$0xff]
    %v75 = vld [vmem:[#allocation2 + $0x78] sm:$0xff]
    %v76 = vld [vmem:[#allocation2 + $0x80] sm:$0xff]
    %v77 = vld [vmem:[#allocation2 + $0x88] sm:$0xff]
    %v78 = vld [vmem:[#allocation2 + $0x90] sm:$0xff]
    %v79 = vld [vmem:[#allocation2 + $0x98] sm:$0xff]
    %v80 = vld [vmem:[#allocation2 + $0xa0] sm:$0xff]
    %v81 = vld [vmem:[#allocation2 + $0xa8] sm:$0xff]
    %v82 = vld [vmem:[#allocation2 + $0xb0] sm:$0xff]
    %v83 = vld [vmem:[#allocation2 + $0xb8] sm:$0xff]
    %v100 = vunpack.c.l.b16 %v44
    %v101 = vunpack.c.l.b16 %v45
    %v102 = vunpack.c.l.b16 %v46
    %v103 = vunpack.c.l.b16 %v47
    %v104 = vunpack.c.l.b16 %v48
    %v105 = vunpack.c.l.b16 %v49
    %v106 = vunpack.c.l.b16 %v50
    %v107 = vunpack.c.l.b16 %v51
    %v108 = vunpack.c.l.b16 %v52
    %v109 = vunpack.c.l.b16 %v53
    %v110 = vunpack.c.l.b16 %v54
    %v111 = vunpack.c.l.b16 %v55
    %v112 = vunpack.c.l.b16 %v56
    %v113 = vunpack.c.l.b16 %v57
    %v114 = vunpack.c.l.b16 %v58
    %v115 = vunpack.c.l.b16 %v59
    %v116 = vpack.c.b16 %v101, %v100
    %v117 = vpack.c.b16 %v103, %v102
    %v118 = vpack.c.b16 %v105, %v104
    %v119 = vpack.c.b16 %v107, %v106
    %v120 = vpack.c.b16 %v109, %v108
    %v121 = vpack.c.b16 %v111, %v110
    %v122 = vpack.c.b16 %v113, %v112
    %v123 = vpack.c.b16 %v115, %v114
    %v148 = vunpack.c.l.b16 %v60
    %v149 = vunpack.c.h.b16 %v60
    %v150 = vunpack.c.l.b16 %v61
    %v151 = vunpack.c.h.b16 %v61
    %v152 = vunpack.c.l.b16 %v62
    %v153 = vunpack.c.h.b16 %v62
    %v154 = vunpack.c.l.b16 %v63
    %v155 = vunpack.c.h.b16 %v63
    %v156 = vunpack.c.l.b16 %v64
    %v157 = vunpack.c.h.b16 %v64
    %v158 = vunpack.c.l.b16 %v65
    %v159 = vunpack.c.h.b16 %v65
    %v160 = vunpack.c.l.b16 %v66
    %v161 = vunpack.c.h.b16 %v66
    %v162 = vunpack.c.l.b16 %v67
    %v163 = vunpack.c.h.b16 %v67
    %v164 = vunpack.c.l.b16 %v68
    %v165 = vunpack.c.h.b16 %v68
    %v166 = vunpack.c.l.b16 %v69
    %v167 = vunpack.c.h.b16 %v69
    %v168 = vunpack.c.l.b16 %v70
    %v169 = vunpack.c.h.b16 %v70
    %v170 = vunpack.c.l.b16 %v71
    %v171 = vunpack.c.h.b16 %v71
    %v172 = vunpack.c.l.b16 %v72
    %v173 = vunpack.c.h.b16 %v72
    %v174 = vunpack.c.l.b16 %v73
    %v175 = vunpack.c.h.b16 %v73
    %v176 = vunpack.c.l.b16 %v74
    %v177 = vunpack.c.h.b16 %v74
    %v178 = vunpack.c.l.b16 %v75
    %v179 = vunpack.c.h.b16 %v75
    %v180 = vunpack.c.l.b16 %v76
    %v181 = vunpack.c.h.b16 %v76
    %v182 = vunpack.c.l.b16 %v77
    %v183 = vunpack.c.h.b16 %v77
    %v184 = vunpack.c.l.b16 %v78
    %v185 = vunpack.c.h.b16 %v78
    %v186 = vunpack.c.l.b16 %v79
    %v187 = vunpack.c.h.b16 %v79
    %v188 = vunpack.c.l.b16 %v80
    %v189 = vunpack.c.h.b16 %v80
    %v190 = vunpack.c.l.b16 %v81
    %v191 = vunpack.c.h.b16 %v81
    %v192 = vunpack.c.l.b16 %v82
    %v193 = vunpack.c.h.b16 %v82
    %v194 = vunpack.c.l.b16 %v83
    %v195 = vunpack.c.h.b16 %v83
    %v196 = vpack.c.b16 %v160, %v148
    %v197 = vpack.c.b16 %v161, %v149
    %v198 = vpack.c.b16 %v162, %v150
    %v199 = vpack.c.b16 %v163, %v151
    %v200 = vpack.c.b16 %v164, %v152
    %v201 = vpack.c.b16 %v165, %v153
    %v202 = vpack.c.b16 %v166, %v154
    %v203 = vpack.c.b16 %v167, %v155
    %v204 = vpack.c.b16 %v168, %v156
    %v205 = vpack.c.b16 %v169, %v157
    %v206 = vpack.c.b16 %v170, %v158
    %v207 = vpack.c.b16 %v171, %v159
    %v208 = vpack.c.b16 %v184, %v172
    %v209 = vpack.c.b16 %v185, %v173
    %v210 = vpack.c.b16 %v186, %v174
    %v211 = vpack.c.b16 %v187, %v175
    %v212 = vpack.c.b16 %v188, %v176
    %v213 = vpack.c.b16 %v189, %v177
    %v214 = vpack.c.b16 %v190, %v178
    %v215 = vpack.c.b16 %v191, %v179
    %v216 = vpack.c.b16 %v192, %v180
    %v217 = vpack.c.b16 %v193, %v181
    %v218 = vpack.c.b16 %v194, %v182
    %v219 = vpack.c.b16 %v195, %v183
    %vm244 = vcmask 261120
    %v246 = vsel %vm244, %v116, 0
    %v249 = vsel %vm244, %v117, 0
    %v252 = vsel %vm244, %v118, 0
    %v255 = vsel %vm244, %v119, 0
    %v258 = vsel %vm244, %v120, 0
    %v261 = vsel %vm244, %v121, 0
    %v264 = vsel %vm244, %v122, 0
    %v267 = vsel %vm244, %v123, 0
    %269 = vmatprep.subr.bf16.mxu0 %v197
    %270 = vmatpush1.bf16.msra.mxu0 %v196
    %271 = vmatprep.subr.bf16.mxu0 %v209
    %272 = vmatpush1.bf16.msra.mxu0 %v208
    %273 = vmatprep.subr.bf16.mxu0 0
    %274 = vmatpush1.bf16.msra.mxu0 0
    %275 = vmatprep.subr.bf16.mxu0 0
    %276 = vmatpush1.bf16.msra.mxu0 0
    %277 = vmatprep.subr.bf16.mxu0 0
    %278 = vmatpush1.bf16.msra.mxu0 0
    %279 = vmatprep.subr.bf16.mxu0 0
    %280 = vmatpush1.bf16.msra.mxu0 0
    %281 = vmatprep.subr.bf16.mxu0 0
    %282 = vmatpush1.bf16.msra.mxu0 0
    %283 = vmatprep.subr.bf16.mxu0 0
    %284 = vmatpush1.bf16.msra.mxu0 0
    %285 = vmatprep.subr.bf16.mxu0 0
    %286 = vmatpush1.bf16.msra.mxu0 0
    %287 = vmatprep.subr.bf16.mxu0 0
    %288 = vmatpush1.bf16.msra.mxu0 0
    %289 = vmatprep.subr.bf16.mxu0 0
    %290 = vmatpush1.bf16.msra.mxu0 0
    %291 = vmatprep.subr.bf16.mxu0 0
    %292 = vmatpush1.bf16.msra.mxu0 0
    %293 = vmatprep.subr.bf16.mxu0 0
    %294 = vmatpush1.bf16.msra.mxu0 0
    %295 = vmatprep.subr.bf16.mxu0 0
    %296 = vmatpush1.bf16.msra.mxu0 0
    %297 = vmatprep.subr.bf16.mxu0 0
    %298 = vmatpush1.bf16.msra.mxu0 0
    %299 = vmatprep.subr.bf16.mxu0 0
    %300 = vmatpush1.bf16.msra.mxu0 0
    %301 = vmatprep.mubr.bf16.mxu0 0
    %302 = vmatmul.mubr.bf16.gmra.mrb[0].mxu0 %v246
    %v303 = vpop.f32.mrb[0].mxu0
    %v304 = vadd.f32 0.0, %v303
    %v305 = vpop.f32.mrb[0].mxu0
    %v306 = vadd.f32 0.0, %v305
    %v307 = vpop.f32.mrb[0].mxu0
    %v308 = vadd.f32 0.0, %v307
    %v309 = vpop.f32.mrb[0].mxu0
    %v310 = vadd.f32 0.0, %v309
    %311 = vmatprep.mubr.bf16.mxu0 0
    %312 = vmatmul.mubr.bf16.gmra.mrb[0].mxu0 %v249
    %v313 = vpop.f32.mrb[0].mxu0
    %v314 = vadd.f32 0.0, %v313
    %v315 = vpop.f32.mrb[0].mxu0
    %v316 = vadd.f32 0.0, %v315
    %v317 = vpop.f32.mrb[0].mxu0
    %v318 = vadd.f32 0.0, %v317
    %v319 = vpop.f32.mrb[0].mxu0
    %v320 = vadd.f32 0.0, %v319
    %321 = vmatprep.mubr.bf16.mxu0 0
    %322 = vmatmul.mubr.bf16.gmra.mrb[0].mxu0 %v252
    %v323 = vpop.f32.mrb[0].mxu0
    %v324 = vadd.f32 0.0, %v323
    %v325 = vpop.f32.mrb[0].mxu0
    %v326 = vadd.f32 0.0, %v325
    %v327 = vpop.f32.mrb[0].mxu0
    %v328 = vadd.f32 0.0, %v327
    %v329 = vpop.f32.mrb[0].mxu0
    %v330 = vadd.f32 0.0, %v329
    %331 = vmatprep.mubr.bf16.mxu0 0
    %332 = vmatmul.mubr.bf16.gmra.mrb[0].mxu0 %v255
    %v333 = vpop.f32.mrb[0].mxu0
    %v334 = vadd.f32 0.0, %v333
    %v335 = vpop.f32.mrb[0].mxu0
    %v336 = vadd.f32 0.0, %v335
    %v337 = vpop.f32.mrb[0].mxu0
    %v338 = vadd.f32 0.0, %v337
    %v339 = vpop.f32.mrb[0].mxu0
    %v340 = vadd.f32 0.0, %v339
    %341 = vmatprep.mubr.bf16.mxu0 0
    %342 = vmatmul.mubr.bf16.gmra.mrb[0].mxu0 %v258
    %v343 = vpop.f32.mrb[0].mxu0
    %v344 = vadd.f32 0.0, %v343
    %v345 = vpop.f32.mrb[0].mxu0
    %v346 = vadd.f32 0.0, %v345
    %v347 = vpop.f32.mrb[0].mxu0
    %v348 = vadd.f32 0.0, %v347
    %v349 = vpop.f32.mrb[0].mxu0
    %v350 = vadd.f32 0.0, %v349
    %351 = vmatprep.mubr.bf16.mxu0 0
    %352 = vmatmul.mubr.bf16.gmra.mrb[0].mxu0 %v261
    %v353 = vpop.f32.mrb[0].mxu0
    %v354 = vadd.f32 0.0, %v353
    %v355 = vpop.f32.mrb[0].mxu0
    %v356 = vadd.f32 0.0, %v355
    %v357 = vpop.f32.mrb[0].mxu0
    %v358 = vadd.f32 0.0, %v357
    %v359 = vpop.f32.mrb[0].mxu0
    %v360 = vadd.f32 0.0, %v359
    %361 = vmatprep.mubr.bf16.mxu0 0
    %362 = vmatmul.mubr.bf16.gmra.mrb[0].mxu0 %v264
    %v363 = vpop.f32.mrb[0].mxu0
    %v364 = vadd.f32 0.0, %v363
    %v365 = vpop.f32.mrb[0].mxu0
    %v366 = vadd.f32 0.0, %v365
    %v367 = vpop.f32.mrb[0].mxu0
    %v368 = vadd.f32 0.0, %v367
    %v369 = vpop.f32.mrb[0].mxu0
    %v370 = vadd.f32 0.0, %v369
    %371 = vmatprep.mubr.bf16.mxu0 0
    %372 = vmatmul.mubr.bf16.gmra.mrb[0].mxu0 %v267
    %v373 = vpop.f32.mrb[0].mxu0
    %v374 = vadd.f32 0.0, %v373
    %v375 = vpop.f32.mrb[0].mxu0
    %v376 = vadd.f32 0.0, %v375
    %v377 = vpop.f32.mrb[0].mxu0
    %v378 = vadd.f32 0.0, %v377
    %v379 = vpop.f32.mrb[0].mxu0
    %v380 = vadd.f32 0.0, %v379
    %381 = vdwg.mxu0
    %382 = vmatprep.subr.bf16.mxu0 %v199
    %383 = vmatpush1.bf16.msra.mxu0 %v198
    %384 = vmatprep.subr.bf16.mxu0 %v211
    %385 = vmatpush1.bf16.msra.mxu0 %v210
    %386 = vmatprep.subr.bf16.mxu0 0
    %387 = vmatpush1.bf16.msra.mxu0 0
    %388 = vmatprep.subr.bf16.mxu0 0
    %389 = vmatpush1.bf16.msra.mxu0 0
    %390 = vmatprep.subr.bf16.mxu0 0
    %391 = vmatpush1.bf16.msra.mxu0 0
    %392 = vmatprep.subr.bf16.mxu0 0
    %393 = vmatpush1.bf16.msra.mxu0 0
    %394 = vmatprep.subr.bf16.mxu0 0
    %395 = vmatpush1.bf16.msra.mxu0 0
    %396 = vmatprep.subr.bf16.mxu0 0
    %397 = vmatpush1.bf16.msra.mxu0 0
    %398 = vmatprep.subr.bf16.mxu0 0
    %399 = vmatpush1.bf16.msra.mxu0 0
    %400 = vmatprep.subr.bf16.mxu0 0
    %401 = vmatpush1.bf16.msra.mxu0 0
    %402 = vmatprep.subr.bf16.mxu0 0
    %403 = vmatpush1.bf16.msra.mxu0 0
    %404 = vmatprep.subr.bf16.mxu0 0
    %405 = vmatpush1.bf16.msra.mxu0 0
    %406 = vmatprep.subr.bf16.mxu0 0
    %407 = vmatpush1.bf16.msra.mxu0 0
    %408 = vmatprep.subr.bf16.mxu0 0
    %409 = vmatpush1.bf16.msra.mxu0 0
    %410 = vmatprep.subr.bf16.mxu0 0
    %411 = vmatpush1.bf16.msra.mxu0 0
    %412 = vmatprep.subr.bf16.mxu0 0
    %413 = vmatpush1.bf16.msra.mxu0 0
    %414 = vmatprep.mubr.bf16.mxu0 0
    %415 = vmatmul.mubr.bf16.gmra.mrb[0].mxu0 %v246
    %v416 = vpop.f32.mrb[0].mxu0
    %v417 = vadd.f32 0.0, %v416
    %v418 = vpop.f32.mrb[0].mxu0
    %v419 = vadd.f32 0.0, %v418
    %v420 = vpop.f32.mrb[0].mxu0
    %v421 = vadd.f32 0.0, %v420
    %v422 = vpop.f32.mrb[0].mxu0
    %v423 = vadd.f32 0.0, %v422
    %424 = vmatprep.mubr.bf16.mxu0 0
    %425 = vmatmul.mubr.bf16.gmra.mrb[0].mxu0 %v249
    %v426 = vpop.f32.mrb[0].mxu0
    %v427 = vadd.f32 0.0, %v426
    %v428 = vpop.f32.mrb[0].mxu0
    %v429 = vadd.f32 0.0, %v428
    %v430 = vpop.f32.mrb[0].mxu0
    %v431 = vadd.f32 0.0, %v430
    %v432 = vpop.f32.mrb[0].mxu0
    %v433 = vadd.f32 0.0, %v432
    %434 = vmatprep.mubr.bf16.mxu0 0
    %435 = vmatmul.mubr.bf16.gmra.mrb[0].mxu0 %v252
    %v436 = vpop.f32.mrb[0].mxu0
    %v437 = vadd.f32 0.0, %v436
    %v438 = vpop.f32.mrb[0].mxu0
    %v439 = vadd.f32 0.0, %v438
    %v440 = vpop.f32.mrb[0].mxu0
    %v441 = vadd.f32 0.0, %v440
    %v442 = vpop.f32.mrb[0].mxu0
    %v443 = vadd.f32 0.0, %v442
    %444 = vmatprep.mubr.bf16.mxu0 0
    %445 = vmatmul.mubr.bf16.gmra.mrb[0].mxu0 %v255
    %v446 = vpop.f32.mrb[0].mxu0
    %v447 = vadd.f32 0.0, %v446
    %v448 = vpop.f32.mrb[0].mxu0
    %v449 = vadd.f32 0.0, %v448
    %v450 = vpop.f32.mrb[0].mxu0
    %v451 = vadd.f32 0.0, %v450
    %v452 = vpop.f32.mrb[0].mxu0
    %v453 = vadd.f32 0.0, %v452
    %454 = vmatprep.mubr.bf16.mxu0 0
    %455 = vmatmul.mubr.bf16.gmra.mrb[0].mxu0 %v258
    %v456 = vpop.f32.mrb[0].mxu0
    %v457 = vadd.f32 0.0, %v456
    %v458 = vpop.f32.mrb[0].mxu0
    %v459 = vadd.f32 0.0, %v458
    %v460 = vpop.f32.mrb[0].mxu0
    %v461 = vadd.f32 0.0, %v460
    %v462 = vpop.f32.mrb[0].mxu0
    %v463 = vadd.f32 0.0, %v462
    %464 = vmatprep.mubr.bf16.mxu0 0
    %465 = vmatmul.mubr.bf16.gmra.mrb[0].mxu0 %v261
    %v466 = vpop.f32.mrb[0].mxu0
    %v467 = vadd.f32 0.0, %v466
    %v468 = vpop.f32.mrb[0].mxu0
    %v469 = vadd.f32 0.0, %v468
    %v470 = vpop.f32.mrb[0].mxu0
    %v471 = vadd.f32 0.0, %v470
    %v472 = vpop.f32.mrb[0].mxu0
    %v473 = vadd.f32 0.0, %v472
    %474 = vmatprep.mubr.bf16.mxu0 0
    %475 = vmatmul.mubr.bf16.gmra.mrb[0].mxu0 %v264
    %v476 = vpop.f32.mrb[0].mxu0
    %v477 = vadd.f32 0.0, %v476
    %v478 = vpop.f32.mrb[0].mxu0
    %v479 = vadd.f32 0.0, %v478
    %v480 = vpop.f32.mrb[0].mxu0
    %v481 = vadd.f32 0.0, %v480
    %v482 = vpop.f32.mrb[0].mxu0
    %v483 = vadd.f32 0.0, %v482
    %484 = vmatprep.mubr.bf16.mxu0 0
    %485 = vmatmul.mubr.bf16.gmra.mrb[0].mxu0 %v267
    %v486 = vpop.f32.mrb[0].mxu0
    %v487 = vadd.f32 0.0, %v486
    %v488 = vpop.f32.mrb[0].mxu0
    %v489 = vadd.f32 0.0, %v488
    %v490 = vpop.f32.mrb[0].mxu0
    %v491 = vadd.f32 0.0, %v490
    %v492 = vpop.f32.mrb[0].mxu0
    %v493 = vadd.f32 0.0, %v492
    %494 = vdwg.mxu0
    %495 = vmatprep.subr.bf16.mxu0 %v201
    %496 = vmatpush1.bf16.msra.mxu0 %v200
    %497 = vmatprep.subr.bf16.mxu0 %v213
    %498 = vmatpush1.bf16.msra.mxu0 %v212
    %499 = vmatprep.subr.bf16.mxu0 0
    %500 = vmatpush1.bf16.msra.mxu0 0
    %501 = vmatprep.subr.bf16.mxu0 0
    %502 = vmatpush1.bf16.msra.mxu0 0
    %503 = vmatprep.subr.bf16.mxu0 0
    %504 = vmatpush1.bf16.msra.mxu0 0
    %505 = vmatprep.subr.bf16.mxu0 0
    %506 = vmatpush1.bf16.msra.mxu0 0
    %507 = vmatprep.subr.bf16.mxu0 0
    %508 = vmatpush1.bf16.msra.mxu0 0
    %509 = vmatprep.subr.bf16.mxu0 0
    %510 = vmatpush1.bf16.msra.mxu0 0
    %511 = vmatprep.subr.bf16.mxu0 0
    %512 = vmatpush1.bf16.msra.mxu0 0
    %513 = vmatprep.subr.bf16.mxu0 0
    %514 = vmatpush1.bf16.msra.mxu0 0
    %515 = vmatprep.subr.bf16.mxu0 0
    %516 = vmatpush1.bf16.msra.mxu0 0
    %517 = vmatprep.subr.bf16.mxu0 0
    %518 = vmatpush1.bf16.msra.mxu0 0
    %519 = vmatprep.subr.bf16.mxu0 0
    %520 = vmatpush1.bf16.msra.mxu0 0
    %521 = vmatprep.subr.bf16.mxu0 0
    %522 = vmatpush1.bf16.msra.mxu0 0
    %523 = vmatprep.subr.bf16.mxu0 0
    %524 = vmatpush1.bf16.msra.mxu0 0
    %525 = vmatprep.subr.bf16.mxu0 0
    %526 = vmatpush1.bf16.msra.mxu0 0
    %527 = vmatprep.mubr.bf16.mxu0 0
    %528 = vmatmul.mubr.bf16.gmra.mrb[0].mxu0 %v246
    %v529 = vpop.f32.mrb[0].mxu0
    %v530 = vadd.f32 0.0, %v529
    %v531 = vpop.f32.mrb[0].mxu0
    %v532 = vadd.f32 0.0, %v531
    %v533 = vpop.f32.mrb[0].mxu0
    %v534 = vadd.f32 0.0, %v533
    %v535 = vpop.f32.mrb[0].mxu0
    %v536 = vadd.f32 0.0, %v535
    %537 = vmatprep.mubr.bf16.mxu0 0
    %538 = vmatmul.mubr.bf16.gmra.mrb[0].mxu0 %v249
    %v539 = vpop.f32.mrb[0].mxu0
    %v540 = vadd.f32 0.0, %v539
    %v541 = vpop.f32.mrb[0].mxu0
    %v542 = vadd.f32 0.0, %v541
    %v543 = vpop.f32.mrb[0].mxu0
    %v544 = vadd.f32 0.0, %v543
    %v545 = vpop.f32.mrb[0].mxu0
    %v546 = vadd.f32 0.0, %v545
    %547 = vmatprep.mubr.bf16.mxu0 0
    %548 = vmatmul.mubr.bf16.gmra.mrb[0].mxu0 %v252
    %v549 = vpop.f32.mrb[0].mxu0
    %v550 = vadd.f32 0.0, %v549
    %v551 = vpop.f32.mrb[0].mxu0
    %v552 = vadd.f32 0.0, %v551
    %v553 = vpop.f32.mrb[0].mxu0
    %v554 = vadd.f32 0.0, %v553
    %v555 = vpop.f32.mrb[0].mxu0
    %v556 = vadd.f32 0.0, %v555
    %557 = vmatprep.mubr.bf16.mxu0 0
    %558 = vmatmul.mubr.bf16.gmra.mrb[0].mxu0 %v255
    %v559 = vpop.f32.mrb[0].mxu0
    %v560 = vadd.f32 0.0, %v559
    %v561 = vpop.f32.mrb[0].mxu0
    %v562 = vadd.f32 0.0, %v561
    %v563 = vpop.f32.mrb[0].mxu0
    %v564 = vadd.f32 0.0, %v563
    %v565 = vpop.f32.mrb[0].mxu0
    %v566 = vadd.f32 0.0, %v565
    %567 = vmatprep.mubr.bf16.mxu0 0
    %568 = vmatmul.mubr.bf16.gmra.mrb[0].mxu0 %v258
    %v569 = vpop.f32.mrb[0].mxu0
    %v570 = vadd.f32 0.0, %v569
    %v571 = vpop.f32.mrb[0].mxu0
    %v572 = vadd.f32 0.0, %v571
    %v573 = vpop.f32.mrb[0].mxu0
    %v574 = vadd.f32 0.0, %v573
    %v575 = vpop.f32.mrb[0].mxu0
    %v576 = vadd.f32 0.0, %v575
    %577 = vmatprep.mubr.bf16.mxu0 0
    %578 = vmatmul.mubr.bf16.gmra.mrb[0].mxu0 %v261
    %v579 = vpop.f32.mrb[0].mxu0
    %v580 = vadd.f32 0.0, %v579
    %v581 = vpop.f32.mrb[0].mxu0
    %v582 = vadd.f32 0.0, %v581
    %v583 = vpop.f32.mrb[0].mxu0
    %v584 = vadd.f32 0.0, %v583
    %v585 = vpop.f32.mrb[0].mxu0
    %v586 = vadd.f32 0.0, %v585
    %587 = vmatprep.mubr.bf16.mxu0 0
    %588 = vmatmul.mubr.bf16.gmra.mrb[0].mxu0 %v264
    %v589 = vpop.f32.mrb[0].mxu0
    %v590 = vadd.f32 0.0, %v589
    %v591 = vpop.f32.mrb[0].mxu0
    %v592 = vadd.f32 0.0, %v591
    %v593 = vpop.f32.mrb[0].mxu0
    %v594 = vadd.f32 0.0, %v593
    %v595 = vpop.f32.mrb[0].mxu0
    %v596 = vadd.f32 0.0, %v595
    %597 = vmatprep.mubr.bf16.mxu0 0
    %598 = vmatmul.mubr.bf16.gmra.mrb[0].mxu0 %v267
    %v599 = vpop.f32.mrb[0].mxu0
    %v600 = vadd.f32 0.0, %v599
    %v601 = vpop.f32.mrb[0].mxu0
    %v602 = vadd.f32 0.0, %v601
    %v603 = vpop.f32.mrb[0].mxu0
    %v604 = vadd.f32 0.0, %v603
    %v605 = vpop.f32.mrb[0].mxu0
    %v606 = vadd.f32 0.0, %v605
    %607 = vdwg.mxu0
    %608 = vmatprep.subr.bf16.mxu0 %v203
    %609 = vmatpush1.bf16.msra.mxu0 %v202
    %610 = vmatprep.subr.bf16.mxu0 %v215
    %611 = vmatpush1.bf16.msra.mxu0 %v214
    %612 = vmatprep.subr.bf16.mxu0 0
    %613 = vmatpush1.bf16.msra.mxu0 0
    %614 = vmatprep.subr.bf16.mxu0 0
    %615 = vmatpush1.bf16.msra.mxu0 0
    %616 = vmatprep.subr.bf16.mxu0 0
    %617 = vmatpush1.bf16.msra.mxu0 0
    %618 = vmatprep.subr.bf16.mxu0 0
    %619 = vmatpush1.bf16.msra.mxu0 0
    %620 = vmatprep.subr.bf16.mxu0 0
    %621 = vmatpush1.bf16.msra.mxu0 0
    %622 = vmatprep.subr.bf16.mxu0 0
    %623 = vmatpush1.bf16.msra.mxu0 0
    %624 = vmatprep.subr.bf16.mxu0 0
    %625 = vmatpush1.bf16.msra.mxu0 0
    %626 = vmatprep.subr.bf16.mxu0 0
    %627 = vmatpush1.bf16.msra.mxu0 0
    %628 = vmatprep.subr.bf16.mxu0 0
    %629 = vmatpush1.bf16.msra.mxu0 0
    %630 = vmatprep.subr.bf16.mxu0 0
    %631 = vmatpush1.bf16.msra.mxu0 0
    %632 = vmatprep.subr.bf16.mxu0 0
    %633 = vmatpush1.bf16.msra.mxu0 0
    %634 = vmatprep.subr.bf16.mxu0 0
    %635 = vmatpush1.bf16.msra.mxu0 0
    %636 = vmatprep.subr.bf16.mxu0 0
    %637 = vmatpush1.bf16.msra.mxu0 0
    %638 = vmatprep.subr.bf16.mxu0 0
    %639 = vmatpush1.bf16.msra.mxu0 0
    %640 = vmatprep.mubr.bf16.mxu0 0
    %641 = vmatmul.mubr.bf16.gmra.mrb[0].mxu0 %v246
    %v642 = vpop.f32.mrb[0].mxu0
    %v643 = vadd.f32 0.0, %v642
    %v644 = vpop.f32.mrb[0].mxu0
    %v645 = vadd.f32 0.0, %v644
    %v646 = vpop.f32.mrb[0].mxu0
    %v647 = vadd.f32 0.0, %v646
    %v648 = vpop.f32.mrb[0].mxu0
    %v649 = vadd.f32 0.0, %v648
    %650 = vmatprep.mubr.bf16.mxu0 0
    %651 = vmatmul.mubr.bf16.gmra.mrb[0].mxu0 %v249
    %v652 = vpop.f32.mrb[0].mxu0
    %v653 = vadd.f32 0.0, %v652
    %v654 = vpop.f32.mrb[0].mxu0
    %v655 = vadd.f32 0.0, %v654
    %v656 = vpop.f32.mrb[0].mxu0
    %v657 = vadd.f32 0.0, %v656
    %v658 = vpop.f32.mrb[0].mxu0
    %v659 = vadd.f32 0.0, %v658
    %660 = vmatprep.mubr.bf16.mxu0 0
    %661 = vmatmul.mubr.bf16.gmra.mrb[0].mxu0 %v252
    %v662 = vpop.f32.mrb[0].mxu0
    %v663 = vadd.f32 0.0, %v662
    %v664 = vpop.f32.mrb[0].mxu0
    %v665 = vadd.f32 0.0, %v664
    %v666 = vpop.f32.mrb[0].mxu0
    %v667 = vadd.f32 0.0, %v666
    %v668 = vpop.f32.mrb[0].mxu0
    %v669 = vadd.f32 0.0, %v668
    %670 = vmatprep.mubr.bf16.mxu0 0
    %671 = vmatmul.mubr.bf16.gmra.mrb[0].mxu0 %v255
    %v672 = vpop.f32.mrb[0].mxu0
    %v673 = vadd.f32 0.0, %v672
    %v674 = vpop.f32.mrb[0].mxu0
    %v675 = vadd.f32 0.0, %v674
    %v676 = vpop.f32.mrb[0].mxu0
    %v677 = vadd.f32 0.0, %v676
    %v678 = vpop.f32.mrb[0].mxu0
    %v679 = vadd.f32 0.0, %v678
    %680 = vmatprep.mubr.bf16.mxu0 0
    %681 = vmatmul.mubr.bf16.gmra.mrb[0].mxu0 %v258
    %v682 = vpop.f32.mrb[0].mxu0
    %v683 = vadd.f32 0.0, %v682
    %v684 = vpop.f32.mrb[0].mxu0
    %v685 = vadd.f32 0.0, %v684
    %v686 = vpop.f32.mrb[0].mxu0
    %v687 = vadd.f32 0.0, %v686
    %v688 = vpop.f32.mrb[0].mxu0
    %v689 = vadd.f32 0.0, %v688
    %690 = vmatprep.mubr.bf16.mxu0 0
    %691 = vmatmul.mubr.bf16.gmra.mrb[0].mxu0 %v261
    %v692 = vpop.f32.mrb[0].mxu0
    %v693 = vadd.f32 0.0, %v692
    %v694 = vpop.f32.mrb[0].mxu0
    %v695 = vadd.f32 0.0, %v694
    %v696 = vpop.f32.mrb[0].mxu0
    %v697 = vadd.f32 0.0, %v696
    %v698 = vpop.f32.mrb[0].mxu0
    %v699 = vadd.f32 0.0, %v698
    %700 = vmatprep.mubr.bf16.mxu0 0
    %701 = vmatmul.mubr.bf16.gmra.mrb[0].mxu0 %v264
    %v702 = vpop.f32.mrb[0].mxu0
    %v703 = vadd.f32 0.0, %v702
    %v704 = vpop.f32.mrb[0].mxu0
    %v705 = vadd.f32 0.0, %v704
    %v706 = vpop.f32.mrb[0].mxu0
    %v707 = vadd.f32 0.0, %v706
    %v708 = vpop.f32.mrb[0].mxu0
    %v709 = vadd.f32 0.0, %v708
    %710 = vmatprep.mubr.bf16.mxu0 0
    %711 = vmatmul.mubr.bf16.gmra.mrb[0].mxu0 %v267
    %v712 = vpop.f32.mrb[0].mxu0
    %v713 = vadd.f32 0.0, %v712
    %v714 = vpop.f32.mrb[0].mxu0
    %v715 = vadd.f32 0.0, %v714
    %v716 = vpop.f32.mrb[0].mxu0
    %v717 = vadd.f32 0.0, %v716
    %v718 = vpop.f32.mrb[0].mxu0
    %v719 = vadd.f32 0.0, %v718
    %720 = vdwg.mxu0
    %721 = vmatprep.subr.bf16.mxu0 %v205
    %722 = vmatpush1.bf16.msra.mxu0 %v204
    %723 = vmatprep.subr.bf16.mxu0 %v217
    %724 = vmatpush1.bf16.msra.mxu0 %v216
    %725 = vmatprep.subr.bf16.mxu0 0
    %726 = vmatpush1.bf16.msra.mxu0 0
    %727 = vmatprep.subr.bf16.mxu0 0
    %728 = vmatpush1.bf16.msra.mxu0 0
    %729 = vmatprep.subr.bf16.mxu0 0
    %730 = vmatpush1.bf16.msra.mxu0 0
    %731 = vmatprep.subr.bf16.mxu0 0
    %732 = vmatpush1.bf16.msra.mxu0 0
    %733 = vmatprep.subr.bf16.mxu0 0
    %734 = vmatpush1.bf16.msra.mxu0 0
    %735 = vmatprep.subr.bf16.mxu0 0
    %736 = vmatpush1.bf16.msra.mxu0 0
    %737 = vmatprep.subr.bf16.mxu0 0
    %738 = vmatpush1.bf16.msra.mxu0 0
    %739 = vmatprep.subr.bf16.mxu0 0
    %740 = vmatpush1.bf16.msra.mxu0 0
    %741 = vmatprep.subr.bf16.mxu0 0
    %742 = vmatpush1.bf16.msra.mxu0 0
    %743 = vmatprep.subr.bf16.mxu0 0
    %744 = vmatpush1.bf16.msra.mxu0 0
    %745 = vmatprep.subr.bf16.mxu0 0
    %746 = vmatpush1.bf16.msra.mxu0 0
    %747 = vmatprep.subr.bf16.mxu0 0
    %748 = vmatpush1.bf16.msra.mxu0 0
    %749 = vmatprep.subr.bf16.mxu0 0
    %750 = vmatpush1.bf16.msra.mxu0 0
    %751 = vmatprep.subr.bf16.mxu0 0
    %752 = vmatpush1.bf16.msra.mxu0 0
    %753 = vmatprep.mubr.bf16.mxu0 0
    %754 = vmatmul.mubr.bf16.gmra.mrb[0].mxu0 %v246
    %v755 = vpop.f32.mrb[0].mxu0
    %v756 = vadd.f32 0.0, %v755
    %v757 = vpop.f32.mrb[0].mxu0
    %v758 = vadd.f32 0.0, %v757
    %v759 = vpop.f32.mrb[0].mxu0
    %v760 = vadd.f32 0.0, %v759
    %v761 = vpop.f32.mrb[0].mxu0
    %v762 = vadd.f32 0.0, %v761
    %763 = vmatprep.mubr.bf16.mxu0 0
    %764 = vmatmul.mubr.bf16.gmra.mrb[0].mxu0 %v249
    %v765 = vpop.f32.mrb[0].mxu0
    %v766 = vadd.f32 0.0, %v765
    %v767 = vpop.f32.mrb[0].mxu0
    %v768 = vadd.f32 0.0, %v767
    %v769 = vpop.f32.mrb[0].mxu0
    %v770 = vadd.f32 0.0, %v769
    %v771 = vpop.f32.mrb[0].mxu0
    %v772 = vadd.f32 0.0, %v771
    %773 = vmatprep.mubr.bf16.mxu0 0
    %774 = vmatmul.mubr.bf16.gmra.mrb[0].mxu0 %v252
    %v775 = vpop.f32.mrb[0].mxu0
    %v776 = vadd.f32 0.0, %v775
    %v777 = vpop.f32.mrb[0].mxu0
    %v778 = vadd.f32 0.0, %v777
    %v779 = vpop.f32.mrb[0].mxu0
    %v780 = vadd.f32 0.0, %v779
    %v781 = vpop.f32.mrb[0].mxu0
    %v782 = vadd.f32 0.0, %v781
    %783 = vmatprep.mubr.bf16.mxu0 0
    %784 = vmatmul.mubr.bf16.gmra.mrb[0].mxu0 %v255
    %v785 = vpop.f32.mrb[0].mxu0
    %v786 = vadd.f32 0.0, %v785
    %v787 = vpop.f32.mrb[0].mxu0
    %v788 = vadd.f32 0.0, %v787
    %v789 = vpop.f32.mrb[0].mxu0
    %v790 = vadd.f32 0.0, %v789
    %v791 = vpop.f32.mrb[0].mxu0
    %v792 = vadd.f32 0.0, %v791
    %793 = vmatprep.mubr.bf16.mxu0 0
    %794 = vmatmul.mubr.bf16.gmra.mrb[0].mxu0 %v258
    %v795 = vpop.f32.mrb[0].mxu0
    %v796 = vadd.f32 0.0, %v795
    %v797 = vpop.f32.mrb[0].mxu0
    %v798 = vadd.f32 0.0, %v797
    %v799 = vpop.f32.mrb[0].mxu0
    %v800 = vadd.f32 0.0, %v799
    %v801 = vpop.f32.mrb[0].mxu0
    %v802 = vadd.f32 0.0, %v801
    %803 = vmatprep.mubr.bf16.mxu0 0
    %804 = vmatmul.mubr.bf16.gmra.mrb[0].mxu0 %v261
    %v805 = vpop.f32.mrb[0].mxu0
    %v806 = vadd.f32 0.0, %v805
    %v807 = vpop.f32.mrb[0].mxu0
    %v808 = vadd.f32 0.0, %v807
    %v809 = vpop.f32.mrb[0].mxu0
    %v810 = vadd.f32 0.0, %v809
    %v811 = vpop.f32.mrb[0].mxu0
    %v812 = vadd.f32 0.0, %v811
    %813 = vmatprep.mubr.bf16.mxu0 0
    %814 = vmatmul.mubr.bf16.gmra.mrb[0].mxu0 %v264
    %v815 = vpop.f32.mrb[0].mxu0
    %v816 = vadd.f32 0.0, %v815
    %v817 = vpop.f32.mrb[0].mxu0
    %v818 = vadd.f32 0.0, %v817
    %v819 = vpop.f32.mrb[0].mxu0
    %v820 = vadd.f32 0.0, %v819
    %v821 = vpop.f32.mrb[0].mxu0
    %v822 = vadd.f32 0.0, %v821
    %823 = vmatprep.mubr.bf16.mxu0 0
    %824 = vmatmul.mubr.bf16.gmra.mrb[0].mxu0 %v267
    %v825 = vpop.f32.mrb[0].mxu0
    %v826 = vadd.f32 0.0, %v825
    %v827 = vpop.f32.mrb[0].mxu0
    %v828 = vadd.f32 0.0, %v827
    %v829 = vpop.f32.mrb[0].mxu0
    %v830 = vadd.f32 0.0, %v829
    %v831 = vpop.f32.mrb[0].mxu0
    %v832 = vadd.f32 0.0, %v831
    %833 = vdwg.mxu0
    %834 = vmatprep.subr.bf16.mxu0 %v207
    %835 = vmatpush1.bf16.msra.mxu0 %v206
    %836 = vmatprep.subr.bf16.mxu0 %v219
    %837 = vmatpush1.bf16.msra.mxu0 %v218
    %838 = vmatprep.subr.bf16.mxu0 0
    %839 = vmatpush1.bf16.msra.mxu0 0
    %840 = vmatprep.subr.bf16.mxu0 0
    %841 = vmatpush1.bf16.msra.mxu0 0
    %842 = vmatprep.subr.bf16.mxu0 0
    %843 = vmatpush1.bf16.msra.mxu0 0
    %844 = vmatprep.subr.bf16.mxu0 0
    %845 = vmatpush1.bf16.msra.mxu0 0
    %846 = vmatprep.subr.bf16.mxu0 0
    %847 = vmatpush1.bf16.msra.mxu0 0
    %848 = vmatprep.subr.bf16.mxu0 0
    %849 = vmatpush1.bf16.msra.mxu0 0
    %850 = vmatprep.subr.bf16.mxu0 0
    %851 = vmatpush1.bf16.msra.mxu0 0
    %852 = vmatprep.subr.bf16.mxu0 0
    %853 = vmatpush1.bf16.msra.mxu0 0
    %854 = vmatprep.subr.bf16.mxu0 0
    %855 = vmatpush1.bf16.msra.mxu0 0
    %856 = vmatprep.subr.bf16.mxu0 0
    %857 = vmatpush1.bf16.msra.mxu0 0
    %858 = vmatprep.subr.bf16.mxu0 0
    %859 = vmatpush1.bf16.msra.mxu0 0
    %860 = vmatprep.subr.bf16.mxu0 0
    %861 = vmatpush1.bf16.msra.mxu0 0
    %862 = vmatprep.subr.bf16.mxu0 0
    %863 = vmatpush1.bf16.msra.mxu0 0
    %864 = vmatprep.subr.bf16.mxu0 0
    %865 = vmatpush1.bf16.msra.mxu0 0
    %866 = vmatprep.mubr.bf16.mxu0 0
    %867 = vmatmul.mubr.bf16.gmra.mrb[0].mxu0 %v246
    %v868 = vpop.f32.mrb[0].mxu0
    %v869 = vadd.f32 0.0, %v868
    %v870 = vpop.f32.mrb[0].mxu0
    %v871 = vadd.f32 0.0, %v870
    %v872 = vpop.f32.mrb[0].mxu0
    %v873 = vadd.f32 0.0, %v872
    %v874 = vpop.f32.mrb[0].mxu0
    %v875 = vadd.f32 0.0, %v874
    %876 = vmatprep.mubr.bf16.mxu0 0
    %877 = vmatmul.mubr.bf16.gmra.mrb[0].mxu0 %v249
    %v878 = vpop.f32.mrb[0].mxu0
    %v879 = vadd.f32 0.0, %v878
    %v880 = vpop.f32.mrb[0].mxu0
    %v881 = vadd.f32 0.0, %v880
    %v882 = vpop.f32.mrb[0].mxu0
    %v883 = vadd.f32 0.0, %v882
    %v884 = vpop.f32.mrb[0].mxu0
    %v885 = vadd.f32 0.0, %v884
    %886 = vmatprep.mubr.bf16.mxu0 0
    %887 = vmatmul.mubr.bf16.gmra.mrb[0].mxu0 %v252
    %v888 = vpop.f32.mrb[0].mxu0
    %v889 = vadd.f32 0.0, %v888
    %v890 = vpop.f32.mrb[0].mxu0
    %v891 = vadd.f32 0.0, %v890
    %v892 = vpop.f32.mrb[0].mxu0
    %v893 = vadd.f32 0.0, %v892
    %v894 = vpop.f32.mrb[0].mxu0
    %v895 = vadd.f32 0.0, %v894
    %896 = vmatprep.mubr.bf16.mxu0 0
    %897 = vmatmul.mubr.bf16.gmra.mrb[0].mxu0 %v255
    %v898 = vpop.f32.mrb[0].mxu0
    %v899 = vadd.f32 0.0, %v898
    %v900 = vpop.f32.mrb[0].mxu0
    %v901 = vadd.f32 0.0, %v900
    %v902 = vpop.f32.mrb[0].mxu0
    %v903 = vadd.f32 0.0, %v902
    %v904 = vpop.f32.mrb[0].mxu0
    %v905 = vadd.f32 0.0, %v904
    %906 = vmatprep.mubr.bf16.mxu0 0
    %907 = vmatmul.mubr.bf16.gmra.mrb[0].mxu0 %v258
    %v908 = vpop.f32.mrb[0].mxu0
    %v909 = vadd.f32 0.0, %v908
    %v910 = vpop.f32.mrb[0].mxu0
    %v911 = vadd.f32 0.0, %v910
    %v912 = vpop.f32.mrb[0].mxu0
    %v913 = vadd.f32 0.0, %v912
    %v914 = vpop.f32.mrb[0].mxu0
    %v915 = vadd.f32 0.0, %v914
    %916 = vmatprep.mubr.bf16.mxu0 0
    %917 = vmatmul.mubr.bf16.gmra.mrb[0].mxu0 %v261
    %v918 = vpop.f32.mrb[0].mxu0
    %v919 = vadd.f32 0.0, %v918
    %v920 = vpop.f32.mrb[0].mxu0
    %v921 = vadd.f32 0.0, %v920
    %v922 = vpop.f32.mrb[0].mxu0
    %v923 = vadd.f32 0.0, %v922
    %v924 = vpop.f32.mrb[0].mxu0
    %v925 = vadd.f32 0.0, %v924
    %926 = vmatprep.mubr.bf16.mxu0 0
    %927 = vmatmul.mubr.bf16.gmra.mrb[0].mxu0 %v264
    %v928 = vpop.f32.mrb[0].mxu0
    %v929 = vadd.f32 0.0, %v928
    %v930 = vpop.f32.mrb[0].mxu0
    %v931 = vadd.f32 0.0, %v930
    %v932 = vpop.f32.mrb[0].mxu0
    %v933 = vadd.f32 0.0, %v932
    %v934 = vpop.f32.mrb[0].mxu0
    %v935 = vadd.f32 0.0, %v934
    %936 = vmatprep.mubr.bf16.mxu0 0
    %937 = vmatmul.mubr.bf16.gmra.mrb[0].mxu0 %v267
    %v938 = vpop.f32.mrb[0].mxu0
    %v939 = vadd.f32 0.0, %v938
    %v940 = vpop.f32.mrb[0].mxu0
    %v941 = vadd.f32 0.0, %v940
    %v942 = vpop.f32.mrb[0].mxu0
    %v943 = vadd.f32 0.0, %v942
    %v944 = vpop.f32.mrb[0].mxu0
    %v945 = vadd.f32 0.0, %v944
    %946 = vdwg.mxu0
    %vm963 = vcmask 1046528
    %v964 = vrot.slane %v306, 1
    %v965 = vrot.slane %v310, 1
    %v966 = vsel %vm963, %v964, %v965
    %v967 = vrot.slane %v316, 1
    %v968 = vsel %vm963, %v965, %v967
    %v969 = vrot.slane %v320, 1
    %v970 = vsel %vm963, %v967, %v969
    %v971 = vrot.slane %v326, 1
    %v972 = vsel %vm963, %v969, %v971
    %v973 = vrot.slane %v330, 1
    %v974 = vsel %vm963, %v971, %v973
    %v975 = vrot.slane %v336, 1
    %v976 = vsel %vm963, %v973, %v975
    %v977 = vrot.slane %v340, 1
    %v978 = vsel %vm963, %v975, %v977
    %v979 = vrot.slane %v346, 1
    %v980 = vsel %vm963, %v977, %v979
    %v981 = vrot.slane %v350, 1
    %v982 = vsel %vm963, %v979, %v981
    %v983 = vrot.slane %v356, 1
    %v984 = vsel %vm963, %v981, %v983
    %v985 = vrot.slane %v360, 1
    %v986 = vsel %vm963, %v983, %v985
    %v987 = vrot.slane %v366, 1
    %v988 = vsel %vm963, %v985, %v987
    %v989 = vrot.slane %v370, 1
    %v990 = vsel %vm963, %v987, %v989
    %v991 = vrot.slane %v376, 1
    %v992 = vsel %vm963, %v989, %v991
    %v993 = vrot.slane %v380, 1
    %v994 = vsel %vm963, %v991, %v993
    %v1012 = vsel %vm963, %v993, %v964
    %v1013 = vadd.f32 %v304, %v966
    %v1014 = vadd.f32 %v308, %v968
    %v1015 = vadd.f32 %v314, %v970
    %v1016 = vadd.f32 %v318, %v972
    %v1017 = vadd.f32 %v324, %v974
    %v1018 = vadd.f32 %v328, %v976
    %v1019 = vadd.f32 %v334, %v978
    %v1020 = vadd.f32 %v338, %v980
    %v1021 = vadd.f32 %v344, %v982
    %v1022 = vadd.f32 %v348, %v984
    %v1023 = vadd.f32 %v354, %v986
    %v1024 = vadd.f32 %v358, %v988
    %v1025 = vadd.f32 %v364, %v990
    %v1026 = vadd.f32 %v368, %v992
    %v1027 = vadd.f32 %v374, %v994
    %v1028 = vadd.f32 %v378, %v1012
    %vm1045 = vcmask 1045504
    %v1046 = vrot.slane %v417, 2
    %v1047 = vrot.slane %v421, 2
    %v1048 = vsel %vm1045, %v1046, %v1047
    %v1049 = vrot.slane %v427, 2
    %v1050 = vsel %vm1045, %v1047, %v1049
    %v1051 = vrot.slane %v431, 2
    %v1052 = vsel %vm1045, %v1049, %v1051
    %v1053 = vrot.slane %v437, 2
    %v1054 = vsel %vm1045, %v1051, %v1053
    %v1055 = vrot.slane %v441, 2
    %v1056 = vsel %vm1045, %v1053, %v1055
    %v1057 = vrot.slane %v447, 2
    %v1058 = vsel %vm1045, %v1055, %v1057
    %v1059 = vrot.slane %v451, 2
    %v1060 = vsel %vm1045, %v1057, %v1059
    %v1061 = vrot.slane %v457, 2
    %v1062 = vsel %vm1045, %v1059, %v1061
    %v1063 = vrot.slane %v461, 2
    %v1064 = vsel %vm1045, %v1061, %v1063
    %v1065 = vrot.slane %v467, 2
    %v1066 = vsel %vm1045, %v1063, %v1065
    %v1067 = vrot.slane %v471, 2
    %v1068 = vsel %vm1045, %v1065, %v1067
    %v1069 = vrot.slane %v477, 2
    %v1070 = vsel %vm1045, %v1067, %v1069
    %v1071 = vrot.slane %v481, 2
    %v1072 = vsel %vm1045, %v1069, %v1071
    %v1073 = vrot.slane %v487, 2
    %v1074 = vsel %vm1045, %v1071, %v1073
    %v1075 = vrot.slane %v491, 2
    %v1076 = vsel %vm1045, %v1073, %v1075
    %v1094 = vsel %vm1045, %v1075, %v1046
    %v1095 = vadd.f32 %v1013, %v1048
    %v1096 = vadd.f32 %v1014, %v1050
    %v1097 = vadd.f32 %v1015, %v1052
    %v1098 = vadd.f32 %v1016, %v1054
    %v1099 = vadd.f32 %v1017, %v1056
    %v1100 = vadd.f32 %v1018, %v1058
    %v1101 = vadd.f32 %v1019, %v1060
    %v1102 = vadd.f32 %v1020, %v1062
    %v1103 = vadd.f32 %v1021, %v1064
    %v1104 = vadd.f32 %v1022, %v1066
    %v1105 = vadd.f32 %v1023, %v1068
    %v1106 = vadd.f32 %v1024, %v1070
    %v1107 = vadd.f32 %v1025, %v1072
    %v1108 = vadd.f32 %v1026, %v1074
    %v1109 = vadd.f32 %v1027, %v1076
    %v1110 = vadd.f32 %v1028, %v1094
    %v1127 = vrot.slane %v530, 1
    %v1128 = vrot.slane %v534, 1
    %v1129 = vsel %vm963, %v1127, %v1128
    %v1130 = vrot.slane %v540, 1
    %v1131 = vsel %vm963, %v1128, %v1130
    %v1132 = vrot.slane %v544, 1
    %v1133 = vsel %vm963, %v1130, %v1132
    %v1134 = vrot.slane %v550, 1
    %v1135 = vsel %vm963, %v1132, %v1134
    %v1136 = vrot.slane %v554, 1
    %v1137 = vsel %vm963, %v1134, %v1136
    %v1138 = vrot.slane %v560, 1
    %v1139 = vsel %vm963, %v1136, %v1138
    %v1140 = vrot.slane %v564, 1
    %v1141 = vsel %vm963, %v1138, %v1140
    %v1142 = vrot.slane %v570, 1
    %v1143 = vsel %vm963, %v1140, %v1142
    %v1144 = vrot.slane %v574, 1
    %v1145 = vsel %vm963, %v1142, %v1144
    %v1146 = vrot.slane %v580, 1
    %v1147 = vsel %vm963, %v1144, %v1146
    %v1148 = vrot.slane %v584, 1
    %v1149 = vsel %vm963, %v1146, %v1148
    %v1150 = vrot.slane %v590, 1
    %v1151 = vsel %vm963, %v1148, %v1150
    %v1152 = vrot.slane %v594, 1
    %v1153 = vsel %vm963, %v1150, %v1152
    %v1154 = vrot.slane %v600, 1
    %v1155 = vsel %vm963, %v1152, %v1154
    %v1156 = vrot.slane %v604, 1
    %v1157 = vsel %vm963, %v1154, %v1156
    %v1175 = vsel %vm963, %v1156, %v1127
    %v1176 = vadd.f32 %v419, %v1129
    %v1177 = vadd.f32 %v423, %v1131
    %v1178 = vadd.f32 %v429, %v1133
    %v1179 = vadd.f32 %v433, %v1135
    %v1180 = vadd.f32 %v439, %v1137
    %v1181 = vadd.f32 %v443, %v1139
    %v1182 = vadd.f32 %v449, %v1141
    %v1183 = vadd.f32 %v453, %v1143
    %v1184 = vadd.f32 %v459, %v1145
    %v1185 = vadd.f32 %v463, %v1147
    %v1186 = vadd.f32 %v469, %v1149
    %v1187 = vadd.f32 %v473, %v1151
    %v1188 = vadd.f32 %v479, %v1153
    %v1189 = vadd.f32 %v483, %v1155
    %v1190 = vadd.f32 %v489, %v1157
    %v1191 = vadd.f32 %v493, %v1175
    %v1208 = vrot.slane %v532, 2
    %v1209 = vrot.slane %v536, 2
    %v1210 = vsel %vm1045, %v1208, %v1209
    %v1211 = vrot.slane %v542, 2
    %v1212 = vsel %vm1045, %v1209, %v1211
    %v1213 = vrot.slane %v546, 2
    %v1214 = vsel %vm1045, %v1211, %v1213
    %v1215 = vrot.slane %v552, 2
    %v1216 = vsel %vm1045, %v1213, %v1215
    %v1217 = vrot.slane %v556, 2
    %v1218 = vsel %vm1045, %v1215, %v1217
    %v1219 = vrot.slane %v562, 2
    %v1220 = vsel %vm1045, %v1217, %v1219
    %v1221 = vrot.slane %v566, 2
    %v1222 = vsel %vm1045, %v1219, %v1221
    %v1223 = vrot.slane %v572, 2
    %v1224 = vsel %vm1045, %v1221, %v1223
    %v1225 = vrot.slane %v576, 2
    %v1226 = vsel %vm1045, %v1223, %v1225
    %v1227 = vrot.slane %v582, 2
    %v1228 = vsel %vm1045, %v1225, %v1227
    %v1229 = vrot.slane %v586, 2
    %v1230 = vsel %vm1045, %v1227, %v1229
    %v1231 = vrot.slane %v592, 2
    %v1232 = vsel %vm1045, %v1229, %v1231
    %v1233 = vrot.slane %v596, 2
    %v1234 = vsel %vm1045, %v1231, %v1233
    %v1235 = vrot.slane %v602, 2
    %v1236 = vsel %vm1045, %v1233, %v1235
    %v1237 = vrot.slane %v606, 2
    %v1238 = vsel %vm1045, %v1235, %v1237
    %v1256 = vsel %vm1045, %v1237, %v1208
    %v1257 = vadd.f32 %v1176, %v1210
    %v1258 = vadd.f32 %v1177, %v1212
    %v1259 = vadd.f32 %v1178, %v1214
    %v1260 = vadd.f32 %v1179, %v1216
    %v1261 = vadd.f32 %v1180, %v1218
    %v1262 = vadd.f32 %v1181, %v1220
    %v1263 = vadd.f32 %v1182, %v1222
    %v1264 = vadd.f32 %v1183, %v1224
    %v1265 = vadd.f32 %v1184, %v1226
    %v1266 = vadd.f32 %v1185, %v1228
    %v1267 = vadd.f32 %v1186, %v1230
    %v1268 = vadd.f32 %v1187, %v1232
    %v1269 = vadd.f32 %v1188, %v1234
    %v1270 = vadd.f32 %v1189, %v1236
    %v1271 = vadd.f32 %v1190, %v1238
    %v1272 = vadd.f32 %v1191, %v1256
    %vm1289 = vcmask 1044480
    %v1290 = vrot.slane %v643, 3
    %v1291 = vrot.slane %v647, 3
    %v1292 = vsel %vm1289, %v1290, %v1291
    %v1293 = vrot.slane %v653, 3
    %v1294 = vsel %vm1289, %v1291, %v1293
    %v1295 = vrot.slane %v657, 3
    %v1296 = vsel %vm1289, %v1293, %v1295
    %v1297 = vrot.slane %v663, 3
    %v1298 = vsel %vm1289, %v1295, %v1297
    %v1299 = vrot.slane %v667, 3
    %v1300 = vsel %vm1289, %v1297, %v1299
    %v1301 = vrot.slane %v673, 3
    %v1302 = vsel %vm1289, %v1299, %v1301
    %v1303 = vrot.slane %v677, 3
    %v1304 = vsel %vm1289, %v1301, %v1303
    %v1305 = vrot.slane %v683, 3
    %v1306 = vsel %vm1289, %v1303, %v1305
    %v1307 = vrot.slane %v687, 3
    %v1308 = vsel %vm1289, %v1305, %v1307
    %v1309 = vrot.slane %v693, 3
    %v1310 = vsel %vm1289, %v1307, %v1309
    %v1311 = vrot.slane %v697, 3
    %v1312 = vsel %vm1289, %v1309, %v1311
    %v1313 = vrot.slane %v703, 3
    %v1314 = vsel %vm1289, %v1311, %v1313
    %v1315 = vrot.slane %v707, 3
    %v1316 = vsel %vm1289, %v1313, %v1315
    %v1317 = vrot.slane %v713, 3
    %v1318 = vsel %vm1289, %v1315, %v1317
    %v1319 = vrot.slane %v717, 3
    %v1320 = vsel %vm1289, %v1317, %v1319
    %v1338 = vsel %vm1289, %v1319, %v1290
    %v1339 = vadd.f32 %v1257, %v1292
    %v1340 = vadd.f32 %v1258, %v1294
    %v1341 = vadd.f32 %v1259, %v1296
    %v1342 = vadd.f32 %v1260, %v1298
    %v1343 = vadd.f32 %v1261, %v1300
    %v1344 = vadd.f32 %v1262, %v1302
    %v1345 = vadd.f32 %v1263, %v1304
    %v1346 = vadd.f32 %v1264, %v1306
    %v1347 = vadd.f32 %v1265, %v1308
    %v1348 = vadd.f32 %v1266, %v1310
    %v1349 = vadd.f32 %v1267, %v1312
    %v1350 = vadd.f32 %v1268, %v1314
    %v1351 = vadd.f32 %v1269, %v1316
    %v1352 = vadd.f32 %v1270, %v1318
    %v1353 = vadd.f32 %v1271, %v1320
    %v1354 = vadd.f32 %v1272, %v1338
    %v1371 = vrot.slane %v756, 1
    %v1372 = vrot.slane %v760, 1
    %v1373 = vsel %vm963, %v1371, %v1372
    %v1374 = vrot.slane %v766, 1
    %v1375 = vsel %vm963, %v1372, %v1374
    %v1376 = vrot.slane %v770, 1
    %v1377 = vsel %vm963, %v1374, %v1376
    %v1378 = vrot.slane %v776, 1
    %v1379 = vsel %vm963, %v1376, %v1378
    %v1380 = vrot.slane %v780, 1
    %v1381 = vsel %vm963, %v1378, %v1380
    %v1382 = vrot.slane %v786, 1
    %v1383 = vsel %vm963, %v1380, %v1382
    %v1384 = vrot.slane %v790, 1
    %v1385 = vsel %vm963, %v1382, %v1384
    %v1386 = vrot.slane %v796, 1
    %v1387 = vsel %vm963, %v1384, %v1386
    %v1388 = vrot.slane %v800, 1
    %v1389 = vsel %vm963, %v1386, %v1388
    %v1390 = vrot.slane %v806, 1
    %v1391 = vsel %vm963, %v1388, %v1390
    %v1392 = vrot.slane %v810, 1
    %v1393 = vsel %vm963, %v1390, %v1392
    %v1394 = vrot.slane %v816, 1
    %v1395 = vsel %vm963, %v1392, %v1394
    %v1396 = vrot.slane %v820, 1
    %v1397 = vsel %vm963, %v1394, %v1396
    %v1398 = vrot.slane %v826, 1
    %v1399 = vsel %vm963, %v1396, %v1398
    %v1400 = vrot.slane %v830, 1
    %v1401 = vsel %vm963, %v1398, %v1400
    %v1419 = vsel %vm963, %v1400, %v1371
    %v1420 = vadd.f32 %v645, %v1373
    %v1421 = vadd.f32 %v649, %v1375
    %v1422 = vadd.f32 %v655, %v1377
    %v1423 = vadd.f32 %v659, %v1379
    %v1424 = vadd.f32 %v665, %v1381
    %v1425 = vadd.f32 %v669, %v1383
    %v1426 = vadd.f32 %v675, %v1385
    %v1427 = vadd.f32 %v679, %v1387
    %v1428 = vadd.f32 %v685, %v1389
    %v1429 = vadd.f32 %v689, %v1391
    %v1430 = vadd.f32 %v695, %v1393
    %v1431 = vadd.f32 %v699, %v1395
    %v1432 = vadd.f32 %v705, %v1397
    %v1433 = vadd.f32 %v709, %v1399
    %v1434 = vadd.f32 %v715, %v1401
    %v1435 = vadd.f32 %v719, %v1419
    %v1452 = vrot.slane %v758, 2
    %v1453 = vrot.slane %v762, 2
    %v1454 = vsel %vm1045, %v1452, %v1453
    %v1455 = vrot.slane %v768, 2
    %v1456 = vsel %vm1045, %v1453, %v1455
    %v1457 = vrot.slane %v772, 2
    %v1458 = vsel %vm1045, %v1455, %v1457
    %v1459 = vrot.slane %v778, 2
    %v1460 = vsel %vm1045, %v1457, %v1459
    %v1461 = vrot.slane %v782, 2
    %v1462 = vsel %vm1045, %v1459, %v1461
    %v1463 = vrot.slane %v788, 2
    %v1464 = vsel %vm1045, %v1461, %v1463
    %v1465 = vrot.slane %v792, 2
    %v1466 = vsel %vm1045, %v1463, %v1465
    %v1467 = vrot.slane %v798, 2
    %v1468 = vsel %vm1045, %v1465, %v1467
    %v1469 = vrot.slane %v802, 2
    %v1470 = vsel %vm1045, %v1467, %v1469
    %v1471 = vrot.slane %v808, 2
    %v1472 = vsel %vm1045, %v1469, %v1471
    %v1473 = vrot.slane %v812, 2
    %v1474 = vsel %vm1045, %v1471, %v1473
    %v1475 = vrot.slane %v818, 2
    %v1476 = vsel %vm1045, %v1473, %v1475
    %v1477 = vrot.slane %v822, 2
    %v1478 = vsel %vm1045, %v1475, %v1477
    %v1479 = vrot.slane %v828, 2
    %v1480 = vsel %vm1045, %v1477, %v1479
    %v1481 = vrot.slane %v832, 2
    %v1482 = vsel %vm1045, %v1479, %v1481
    %v1500 = vsel %vm1045, %v1481, %v1452
    %v1501 = vadd.f32 %v1420, %v1454
    %v1502 = vadd.f32 %v1421, %v1456
    %v1503 = vadd.f32 %v1422, %v1458
    %v1504 = vadd.f32 %v1423, %v1460
    %v1505 = vadd.f32 %v1424, %v1462
    %v1506 = vadd.f32 %v1425, %v1464
    %v1507 = vadd.f32 %v1426, %v1466
    %v1508 = vadd.f32 %v1427, %v1468
    %v1509 = vadd.f32 %v1428, %v1470
    %v1510 = vadd.f32 %v1429, %v1472
    %v1511 = vadd.f32 %v1430, %v1474
    %v1512 = vadd.f32 %v1431, %v1476
    %v1513 = vadd.f32 %v1432, %v1478
    %v1514 = vadd.f32 %v1433, %v1480
    %v1515 = vadd.f32 %v1434, %v1482
    %v1516 = vadd.f32 %v1435, %v1500
    %v1533 = vrot.slane %v869, 3
    %v1534 = vrot.slane %v873, 3
    %v1535 = vsel %vm1289, %v1533, %v1534
    %v1536 = vrot.slane %v879, 3
    %v1537 = vsel %vm1289, %v1534, %v1536
    %v1538 = vrot.slane %v883, 3
    %v1539 = vsel %vm1289, %v1536, %v1538
    %v1540 = vrot.slane %v889, 3
    %v1541 = vsel %vm1289, %v1538, %v1540
    %v1542 = vrot.slane %v893, 3
    %v1543 = vsel %vm1289, %v1540, %v1542
    %v1544 = vrot.slane %v899, 3
    %v1545 = vsel %vm1289, %v1542, %v1544
    %v1546 = vrot.slane %v903, 3
    %v1547 = vsel %vm1289, %v1544, %v1546
    %v1548 = vrot.slane %v909, 3
    %v1549 = vsel %vm1289, %v1546, %v1548
    %v1550 = vrot.slane %v913, 3
    %v1551 = vsel %vm1289, %v1548, %v1550
    %v1552 = vrot.slane %v919, 3
    %v1553 = vsel %vm1289, %v1550, %v1552
    %v1554 = vrot.slane %v923, 3
    %v1555 = vsel %vm1289, %v1552, %v1554
    %v1556 = vrot.slane %v929, 3
    %v1557 = vsel %vm1289, %v1554, %v1556
    %v1558 = vrot.slane %v933, 3
    %v1559 = vsel %vm1289, %v1556, %v1558
    %v1560 = vrot.slane %v939, 3
    %v1561 = vsel %vm1289, %v1558, %v1560
    %v1562 = vrot.slane %v943, 3
    %v1563 = vsel %vm1289, %v1560, %v1562
    %v1581 = vsel %vm1289, %v1562, %v1533
    %v1582 = vadd.f32 %v1501, %v1535
    %v1583 = vadd.f32 %v1502, %v1537
    %v1584 = vadd.f32 %v1503, %v1539
    %v1585 = vadd.f32 %v1504, %v1541
    %v1586 = vadd.f32 %v1505, %v1543
    %v1587 = vadd.f32 %v1506, %v1545
    %v1588 = vadd.f32 %v1507, %v1547
    %v1589 = vadd.f32 %v1508, %v1549
    %v1590 = vadd.f32 %v1509, %v1551
    %v1591 = vadd.f32 %v1510, %v1553
    %v1592 = vadd.f32 %v1511, %v1555
    %v1593 = vadd.f32 %v1512, %v1557
    %v1594 = vadd.f32 %v1513, %v1559
    %v1595 = vadd.f32 %v1514, %v1561
    %v1596 = vadd.f32 %v1515, %v1563
    %v1597 = vadd.f32 %v1516, %v1581
    %vm1614 = vcmask 1043456
    %v1615 = vrot.slane %v871, 4
    %v1616 = vrot.slane %v875, 4
    %v1617 = vsel %vm1614, %v1615, %v1616
    %v1618 = vrot.slane %v881, 4
    %v1619 = vsel %vm1614, %v1616, %v1618
    %v1620 = vrot.slane %v885, 4
    %v1621 = vsel %vm1614, %v1618, %v1620
    %v1622 = vrot.slane %v891, 4
    %v1623 = vsel %vm1614, %v1620, %v1622
    %v1624 = vrot.slane %v895, 4
    %v1625 = vsel %vm1614, %v1622, %v1624
    %v1626 = vrot.slane %v901, 4
    %v1627 = vsel %vm1614, %v1624, %v1626
    %v1628 = vrot.slane %v905, 4
    %v1629 = vsel %vm1614, %v1626, %v1628
    %v1630 = vrot.slane %v911, 4
    %v1631 = vsel %vm1614, %v1628, %v1630
    %v1632 = vrot.slane %v915, 4
    %v1633 = vsel %vm1614, %v1630, %v1632
    %v1634 = vrot.slane %v921, 4
    %v1635 = vsel %vm1614, %v1632, %v1634
    %v1636 = vrot.slane %v925, 4
    %v1637 = vsel %vm1614, %v1634, %v1636
    %v1638 = vrot.slane %v931, 4
    %v1639 = vsel %vm1614, %v1636, %v1638
    %v1640 = vrot.slane %v935, 4
    %v1641 = vsel %vm1614, %v1638, %v1640
    %v1642 = vrot.slane %v941, 4
    %v1643 = vsel %vm1614, %v1640, %v1642
    %v1644 = vrot.slane %v945, 4
    %v1645 = vsel %vm1614, %v1642, %v1644
    %v1663 = vsel %vm1614, %v1644, %v1615
    %v1664 = vadd.f32 %v1582, %v1617
    %v1665 = vadd.f32 %v1583, %v1619
    %v1666 = vadd.f32 %v1584, %v1621
    %v1667 = vadd.f32 %v1585, %v1623
    %v1668 = vadd.f32 %v1586, %v1625
    %v1669 = vadd.f32 %v1587, %v1627
    %v1670 = vadd.f32 %v1588, %v1629
    %v1671 = vadd.f32 %v1589, %v1631
    %v1672 = vadd.f32 %v1590, %v1633
    %v1673 = vadd.f32 %v1591, %v1635
    %v1674 = vadd.f32 %v1592, %v1637
    %v1675 = vadd.f32 %v1593, %v1639
    %v1676 = vadd.f32 %v1594, %v1641
    %v1677 = vadd.f32 %v1595, %v1643
    %v1678 = vadd.f32 %v1596, %v1645
    %v1679 = vadd.f32 %v1597, %v1663
    %v1680 = vld [vmem:[#allocation5] ss:$8 sm:$0x7]
    %v1682 = vlaneseq
    %v1683 = vshrl.u32 %v1682, 7
    %v1684 = vsub.s32 0, %v1683
    %v1685 = vrot.slane %v1680, %v1684
    %v1686 = vlaneseq
    %v1687 = vshrl.u32 %v1686, 7
    %v1688 = vsub.s32 1, %v1687
    %v1689 = vrot.slane %v1680, %v1688
    %v1690 = vlaneseq
    %v1691 = vshrl.u32 %v1690, 7
    %v1692 = vsub.s32 2, %v1691
    %v1693 = vrot.slane %v1680, %v1692
    %v1697 = vadd.f32 %v1095, %v1685
    %v1698 = vadd.f32 %v1339, %v1689
    %v1699 = vadd.f32 %v1664, %v1693
    %v1700 = vadd.f32 %v1096, %v1685
    %v1701 = vadd.f32 %v1340, %v1689
    %v1702 = vadd.f32 %v1665, %v1693
    %v1703 = vadd.f32 %v1097, %v1685
    %v1704 = vadd.f32 %v1341, %v1689
    %v1705 = vadd.f32 %v1666, %v1693
    %v1706 = vadd.f32 %v1098, %v1685
    %v1707 = vadd.f32 %v1342, %v1689
    %v1708 = vadd.f32 %v1667, %v1693
    %v1709 = vadd.f32 %v1099, %v1685
    %v1710 = vadd.f32 %v1343, %v1689
    %v1711 = vadd.f32 %v1668, %v1693
    %v1712 = vadd.f32 %v1100, %v1685
    %v1713 = vadd.f32 %v1344, %v1689
    %v1714 = vadd.f32 %v1669, %v1693
    %v1715 = vadd.f32 %v1101, %v1685
    %v1716 = vadd.f32 %v1345, %v1689
    %v1717 = vadd.f32 %v1670, %v1693
    %v1718 = vadd.f32 %v1102, %v1685
    %v1719 = vadd.f32 %v1346, %v1689
    %v1720 = vadd.f32 %v1671, %v1693
    %v1721 = vadd.f32 %v1103, %v1685
    %v1722 = vadd.f32 %v1347, %v1689
    %v1723 = vadd.f32 %v1672, %v1693
    %v1724 = vadd.f32 %v1104, %v1685
    %v1725 = vadd.f32 %v1348, %v1689
    %v1726 = vadd.f32 %v1673, %v1693
    %v1727 = vadd.f32 %v1105, %v1685
    %v1728 = vadd.f32 %v1349, %v1689
    %v1729 = vadd.f32 %v1674, %v1693
    %v1730 = vadd.f32 %v1106, %v1685
    %v1731 = vadd.f32 %v1350, %v1689
    %v1732 = vadd.f32 %v1675, %v1693
    %v1733 = vadd.f32 %v1107, %v1685
    %v1734 = vadd.f32 %v1351, %v1689
    %v1735 = vadd.f32 %v1676, %v1693
    %v1736 = vadd.f32 %v1108, %v1685
    %v1737 = vadd.f32 %v1352, %v1689
    %v1738 = vadd.f32 %v1677, %v1693
    %v1739 = vadd.f32 %v1109, %v1685
    %v1740 = vadd.f32 %v1353, %v1689
    %v1741 = vadd.f32 %v1678, %v1693
    %v1742 = vadd.f32 %v1110, %v1685
    %v1743 = vadd.f32 %v1354, %v1689
    %v1744 = vadd.f32 %v1679, %v1693
    %v1745 = vmax.f32 %v1697, 0.0
    %v1746 = vmax.f32 %v1698, 0.0
    %v1747 = vmax.f32 %v1699, 0.0
    %v1748 = vmax.f32 %v1700, 0.0
    %v1749 = vmax.f32 %v1701, 0.0
    %v1750 = vmax.f32 %v1702, 0.0
    %v1751 = vmax.f32 %v1703, 0.0
    %v1752 = vmax.f32 %v1704, 0.0
    %v1753 = vmax.f32 %v1705, 0.0
    %v1754 = vmax.f32 %v1706, 0.0
    %v1755 = vmax.f32 %v1707, 0.0
    %v1756 = vmax.f32 %v1708, 0.0
    %v1757 = vmax.f32 %v1709, 0.0
    %v1758 = vmax.f32 %v1710, 0.0
    %v1759 = vmax.f32 %v1711, 0.0
    %v1760 = vmax.f32 %v1712, 0.0
    %v1761 = vmax.f32 %v1713, 0.0
    %v1762 = vmax.f32 %v1714, 0.0
    %v1763 = vmax.f32 %v1715, 0.0
    %v1764 = vmax.f32 %v1716, 0.0
    %v1765 = vmax.f32 %v1717, 0.0
    %v1766 = vmax.f32 %v1718, 0.0
    %v1767 = vmax.f32 %v1719, 0.0
    %v1768 = vmax.f32 %v1720, 0.0
    %v1769 = vmax.f32 %v1721, 0.0
    %v1770 = vmax.f32 %v1722, 0.0
    %v1771 = vmax.f32 %v1723, 0.0
    %v1772 = vmax.f32 %v1724, 0.0
    %v1773 = vmax.f32 %v1725, 0.0
    %v1774 = vmax.f32 %v1726, 0.0
    %v1775 = vmax.f32 %v1727, 0.0
    %v1776 = vmax.f32 %v1728, 0.0
    %v1777 = vmax.f32 %v1729, 0.0
    %v1778 = vmax.f32 %v1730, 0.0
    %v1779 = vmax.f32 %v1731, 0.0
    %v1780 = vmax.f32 %v1732, 0.0
    %v1781 = vmax.f32 %v1733, 0.0
    %v1782 = vmax.f32 %v1734, 0.0
    %v1783 = vmax.f32 %v1735, 0.0
    %v1784 = vmax.f32 %v1736, 0.0
    %v1785 = vmax.f32 %v1737, 0.0
    %v1786 = vmax.f32 %v1738, 0.0
    %v1787 = vmax.f32 %v1739, 0.0
    %v1788 = vmax.f32 %v1740, 0.0
    %v1789 = vmax.f32 %v1741, 0.0
    %v1790 = vmax.f32 %v1742, 0.0
    %v1791 = vmax.f32 %v1743, 0.0
    %v1792 = vmax.f32 %v1744, 0.0
    %v1793 = vld [vmem:[#allocation5 + $0x18] sm:$0xff]
    %v1794 = vld [vmem:[#allocation5 + $0x20] sm:$0xff]
    %v1795 = vld [vmem:[#allocation5 + $0x28] sm:$0xff]
    %v1796 = vld [vmem:[#allocation5 + $0x30] sm:$0xff]
    %v1797 = vld [vmem:[#allocation5 + $0x38] sm:$0xff]
    %v1798 = vld [vmem:[#allocation5 + $0x40] sm:$0xff]
    %v1799 = vmul.f32 %v1745, %v1793
    %v1800 = vmul.f32 %v1746, %v1794
    %v1801 = vmul.f32 %v1747, %v1795
    %v1802 = vmul.f32 %v1748, %v1796
    %v1803 = vmul.f32 %v1749, %v1797
    %v1804 = vmul.f32 %v1750, %v1798
    %v1805 = vmax.f32 %v1799, %v1802
    %v1806 = vrot.slane %v1805, 4
    %v1807 = vmax.f32 %v1805, %v1806
    %v1808 = vrot.slane %v1807, 2
    %v1809 = vmax.f32 %v1807, %v1808
    %v1810 = vrot.slane %v1809, 1
    %v1811 = vmax.f32 %v1809, %v1810
    %v1812 = vmax.f32 %v1800, %v1803
    %v1813 = vrot.slane %v1812, 4
    %v1814 = vmax.f32 %v1812, %v1813
    %v1815 = vrot.slane %v1814, 2
    %v1816 = vmax.f32 %v1814, %v1815
    %v1817 = vrot.slane %v1816, 1
    %v1818 = vmax.f32 %v1816, %v1817
    %v1819 = vmax.f32 %v1801, %v1804
    %v1820 = vrot.slane %v1819, 4
    %v1821 = vmax.f32 %v1819, %v1820
    %v1822 = vrot.slane %v1821, 2
    %v1823 = vmax.f32 %v1821, %v1822
    %v1824 = vrot.slane %v1823, 1
    %v1825 = vmax.f32 %v1823, %v1824
    %v1826 = vmul.f32 %v1751, %v1793
    %v1827 = vmul.f32 %v1752, %v1794
    %v1828 = vmul.f32 %v1753, %v1795
    %v1829 = vmul.f32 %v1754, %v1796
    %v1830 = vmul.f32 %v1755, %v1797
    %v1831 = vmul.f32 %v1756, %v1798
    %v1832 = vmax.f32 %v1826, %v1829
    %v1833 = vrot.slane %v1832, 4
    %v1834 = vmax.f32 %v1832, %v1833
    %v1835 = vrot.slane %v1834, 2
    %v1836 = vmax.f32 %v1834, %v1835
    %v1837 = vrot.slane %v1836, 1
    %v1838 = vmax.f32 %v1836, %v1837
    %v1839 = vmax.f32 %v1827, %v1830
    %v1840 = vrot.slane %v1839, 4
    %v1841 = vmax.f32 %v1839, %v1840
    %v1842 = vrot.slane %v1841, 2
    %v1843 = vmax.f32 %v1841, %v1842
    %v1844 = vrot.slane %v1843, 1
    %v1845 = vmax.f32 %v1843, %v1844
    %v1846 = vmax.f32 %v1828, %v1831
    %v1847 = vrot.slane %v1846, 4
    %v1848 = vmax.f32 %v1846, %v1847
    %v1849 = vrot.slane %v1848, 2
    %v1850 = vmax.f32 %v1848, %v1849
    %v1851 = vrot.slane %v1850, 1
    %v1852 = vmax.f32 %v1850, %v1851
    %v1853 = vmul.f32 %v1757, %v1793
    %v1854 = vmul.f32 %v1758, %v1794
    %v1855 = vmul.f32 %v1759, %v1795
    %v1856 = vmul.f32 %v1760, %v1796
    %v1857 = vmul.f32 %v1761, %v1797
    %v1858 = vmul.f32 %v1762, %v1798
    %v1859 = vmax.f32 %v1853, %v1856
    %v1860 = vrot.slane %v1859, 4
    %v1861 = vmax.f32 %v1859, %v1860
    %v1862 = vrot.slane %v1861, 2
    %v1863 = vmax.f32 %v1861, %v1862
    %v1864 = vrot.slane %v1863, 1
    %v1865 = vmax.f32 %v1863, %v1864
    %v1866 = vmax.f32 %v1854, %v1857
    %v1867 = vrot.slane %v1866, 4
    %v1868 = vmax.f32 %v1866, %v1867
    %v1869 = vrot.slane %v1868, 2
    %v1870 = vmax.f32 %v1868, %v1869
    %v1871 = vrot.slane %v1870, 1
    %v1872 = vmax.f32 %v1870, %v1871
    %v1873 = vmax.f32 %v1855, %v1858
    %v1874 = vrot.slane %v1873, 4
    %v1875 = vmax.f32 %v1873, %v1874
    %v1876 = vrot.slane %v1875, 2
    %v1877 = vmax.f32 %v1875, %v1876
    %v1878 = vrot.slane %v1877, 1
    %v1879 = vmax.f32 %v1877, %v1878
    %v1880 = vmul.f32 %v1763, %v1793
    %v1881 = vmul.f32 %v1764, %v1794
    %v1882 = vmul.f32 %v1765, %v1795
    %v1883 = vmul.f32 %v1766, %v1796
    %v1884 = vmul.f32 %v1767, %v1797
    %v1885 = vmul.f32 %v1768, %v1798
    %v1886 = vmax.f32 %v1880, %v1883
    %v1887 = vrot.slane %v1886, 4
    %v1888 = vmax.f32 %v1886, %v1887
    %v1889 = vrot.slane %v1888, 2
    %v1890 = vmax.f32 %v1888, %v1889
    %v1891 = vrot.slane %v1890, 1
    %v1892 = vmax.f32 %v1890, %v1891
    %v1893 = vmax.f32 %v1881, %v1884
    %v1894 = vrot.slane %v1893, 4
    %v1895 = vmax.f32 %v1893, %v1894
    %v1896 = vrot.slane %v1895, 2
    %v1897 = vmax.f32 %v1895, %v1896
    %v1898 = vrot.slane %v1897, 1
    %v1899 = vmax.f32 %v1897, %v1898
    %v1900 = vmax.f32 %v1882, %v1885
    %v1901 = vrot.slane %v1900, 4
    %v1902 = vmax.f32 %v1900, %v1901
    %v1903 = vrot.slane %v1902, 2
    %v1904 = vmax.f32 %v1902, %v1903
    %v1905 = vrot.slane %v1904, 1
    %v1906 = vmax.f32 %v1904, %v1905
    %v1907 = vmul.f32 %v1769, %v1793
    %v1908 = vmul.f32 %v1770, %v1794
    %v1909 = vmul.f32 %v1771, %v1795
    %v1910 = vmul.f32 %v1772, %v1796
    %v1911 = vmul.f32 %v1773, %v1797
    %v1912 = vmul.f32 %v1774, %v1798
    %v1913 = vmax.f32 %v1907, %v1910
    %v1914 = vrot.slane %v1913, 4
    %v1915 = vmax.f32 %v1913, %v1914
    %v1916 = vrot.slane %v1915, 2
    %v1917 = vmax.f32 %v1915, %v1916
    %v1918 = vrot.slane %v1917, 1
    %v1919 = vmax.f32 %v1917, %v1918
    %v1920 = vmax.f32 %v1908, %v1911
    %v1921 = vrot.slane %v1920, 4
    %v1922 = vmax.f32 %v1920, %v1921
    %v1923 = vrot.slane %v1922, 2
    %v1924 = vmax.f32 %v1922, %v1923
    %v1925 = vrot.slane %v1924, 1
    %v1926 = vmax.f32 %v1924, %v1925
    %v1927 = vmax.f32 %v1909, %v1912
    %v1928 = vrot.slane %v1927, 4
    %v1929 = vmax.f32 %v1927, %v1928
    %v1930 = vrot.slane %v1929, 2
    %v1931 = vmax.f32 %v1929, %v1930
    %v1932 = vrot.slane %v1931, 1
    %v1933 = vmax.f32 %v1931, %v1932
    %v1934 = vmul.f32 %v1775, %v1793
    %v1935 = vmul.f32 %v1776, %v1794
    %v1936 = vmul.f32 %v1777, %v1795
    %v1937 = vmul.f32 %v1778, %v1796
    %v1938 = vmul.f32 %v1779, %v1797
    %v1939 = vmul.f32 %v1780, %v1798
    %v1940 = vmax.f32 %v1934, %v1937
    %v1941 = vrot.slane %v1940, 4
    %v1942 = vmax.f32 %v1940, %v1941
    %v1943 = vrot.slane %v1942, 2
    %v1944 = vmax.f32 %v1942, %v1943
    %v1945 = vrot.slane %v1944, 1
    %v1946 = vmax.f32 %v1944, %v1945
    %v1947 = vmax.f32 %v1935, %v1938
    %v1948 = vrot.slane %v1947, 4
    %v1949 = vmax.f32 %v1947, %v1948
    %v1950 = vrot.slane %v1949, 2
    %v1951 = vmax.f32 %v1949, %v1950
    %v1952 = vrot.slane %v1951, 1
    %v1953 = vmax.f32 %v1951, %v1952
    %v1954 = vmax.f32 %v1936, %v1939
    %v1955 = vrot.slane %v1954, 4
    %v1956 = vmax.f32 %v1954, %v1955
    %v1957 = vrot.slane %v1956, 2
    %v1958 = vmax.f32 %v1956, %v1957
    %v1959 = vrot.slane %v1958, 1
    %v1960 = vmax.f32 %v1958, %v1959
    %v1961 = vmul.f32 %v1781, %v1793
    %v1962 = vmul.f32 %v1782, %v1794
    %v1963 = vmul.f32 %v1783, %v1795
    %v1964 = vmul.f32 %v1784, %v1796
    %v1965 = vmul.f32 %v1785, %v1797
    %v1966 = vmul.f32 %v1786, %v1798
    %v1967 = vmax.f32 %v1961, %v1964
    %v1968 = vrot.slane %v1967, 4
    %v1969 = vmax.f32 %v1967, %v1968
    %v1970 = vrot.slane %v1969, 2
    %v1971 = vmax.f32 %v1969, %v1970
    %v1972 = vrot.slane %v1971, 1
    %v1973 = vmax.f32 %v1971, %v1972
    %v1974 = vmax.f32 %v1962, %v1965
    %v1975 = vrot.slane %v1974, 4
    %v1976 = vmax.f32 %v1974, %v1975
    %v1977 = vrot.slane %v1976, 2
    %v1978 = vmax.f32 %v1976, %v1977
    %v1979 = vrot.slane %v1978, 1
    %v1980 = vmax.f32 %v1978, %v1979
    %v1981 = vmax.f32 %v1963, %v1966
    %v1982 = vrot.slane %v1981, 4
    %v1983 = vmax.f32 %v1981, %v1982
    %v1984 = vrot.slane %v1983, 2
    %v1985 = vmax.f32 %v1983, %v1984
    %v1986 = vrot.slane %v1985, 1
    %v1987 = vmax.f32 %v1985, %v1986
    %v1988 = vmul.f32 %v1787, %v1793
    %v1989 = vmul.f32 %v1788, %v1794
    %v1990 = vmul.f32 %v1789, %v1795
    %v1991 = vmul.f32 %v1790, %v1796
    %v1992 = vmul.f32 %v1791, %v1797
    %v1993 = vmul.f32 %v1792, %v1798
    %v1994 = vmax.f32 %v1988, %v1991
    %v1995 = vrot.slane %v1994, 4
    %v1996 = vmax.f32 %v1994, %v1995
    %v1997 = vrot.slane %v1996, 2
    %v1998 = vmax.f32 %v1996, %v1997
    %v1999 = vrot.slane %v1998, 1
    %v2000 = vmax.f32 %v1998, %v1999
    %v2001 = vmax.f32 %v1989, %v1992
    %v2002 = vrot.slane %v2001, 4
    %v2003 = vmax.f32 %v2001, %v2002
    %v2004 = vrot.slane %v2003, 2
    %v2005 = vmax.f32 %v2003, %v2004
    %v2006 = vrot.slane %v2005, 1
    %v2007 = vmax.f32 %v2005, %v2006
    %v2008 = vmax.f32 %v1990, %v1993
    %v2009 = vrot.slane %v2008, 4
    %v2010 = vmax.f32 %v2008, %v2009
    %v2011 = vrot.slane %v2010, 2
    %v2012 = vmax.f32 %v2010, %v2011
    %v2013 = vrot.slane %v2012, 1
    %v2014 = vmax.f32 %v2012, %v2013
    %vm2015 = vcmask 1040384
    %v2016 = vsel %vm2015, %v1811, %v1838
    %v2017 = vsel %vm2015, %v1818, %v1845
    %v2018 = vsel %vm2015, %v1825, %v1852
    %vm2019 = vcmask 1041408
    %v2020 = vsel %vm2019, %v2016, %v1865
    %v2021 = vsel %vm2019, %v2017, %v1872
    %v2022 = vsel %vm2019, %v2018, %v1879
    %vm2023 = vcmask 1042432
    %v2024 = vsel %vm2023, %v2020, %v1892
    %v2025 = vsel %vm2023, %v2021, %v1899
    %v2026 = vsel %vm2023, %v2022, %v1906
    %v2027 = vsel %vm1614, %v2024, %v1919
    %v2028 = vsel %vm1614, %v2025, %v1926
    %v2029 = vsel %vm1614, %v2026, %v1933
    %v2030 = vsel %vm1289, %v2027, %v1946
    %v2031 = vsel %vm1289, %v2028, %v1953
    %v2032 = vsel %vm1289, %v2029, %v1960
    %v2033 = vsel %vm1045, %v2030, %v1973
    %v2034 = vsel %vm1045, %v2031, %v1980
    %v2035 = vsel %vm1045, %v2032, %v1987
    %v2036 = vsel %vm963, %v2033, %v2000
    %v2037 = vsel %vm963, %v2034, %v2007
    %v2038 = vsel %vm963, %v2035, %v2014
    %v2039 = vld [vmem:[#allocation5 + $0x48] sm:$0xff]
    %v2040 = vld [vmem:[#allocation5 + $0x60] sm:$0xff]
    %v2041 = vld [vmem:[#allocation5 + $0x78] sm:$0xff]
    %v2042 = vld [vmem:[#allocation5 + $0x90] sm:$0xff]
    %v2043 = vld [vmem:[#allocation5 + $0xa8] sm:$0xff]
    %v2044 = vld [vmem:[#allocation5 + $0xc0] sm:$0xff]
    %v2045 = vld [vmem:[#allocation5 + $0xd8] sm:$0xff]
    %v2046 = vld [vmem:[#allocation5 + $0xf0] sm:$0xff]
    %v2047 = vld [vmem:[#allocation5 + $0x108] sm:$0xff]
    %v2048 = vld [vmem:[#allocation5 + $0x120] sm:$0xff]
    %v2049 = vld [vmem:[#allocation5 + $0x138] sm:$0xff]
    %v2050 = vld [vmem:[#allocation5 + $0x150] sm:$0xff]
    %v2051 = vld [vmem:[#allocation5 + $0x168] sm:$0xff]
    %v2052 = vld [vmem:[#allocation5 + $0x180] sm:$0xff]
    %v2053 = vld [vmem:[#allocation5 + $0x198] sm:$0xff]
    %v2054 = vld [vmem:[#allocation5 + $0x1b0] sm:$0xff]
    %v2055 = vld [vmem:[#allocation5 + $0x1c8] sm:$0xff]
    %v2056 = vld [vmem:[#allocation5 + $0x1e0] sm:$0xff]
    %v2057 = vld [vmem:[#allocation5 + $0x1f8] sm:$0xff]
    %v2058 = vld [vmem:[#allocation5 + $0x210] sm:$0xff]
    %v2059 = vld [vmem:[#allocation5 + $0x228] sm:$0xff]
    %v2060 = vld [vmem:[#allocation5 + $0x240] sm:$0xff]
    %v2061 = vld [vmem:[#allocation5 + $0x258] sm:$0xff]
    %v2062 = vld [vmem:[#allocation5 + $0x270] sm:$0xff]
    %v2063 = vld [vmem:[#allocation5 + $0x288] sm:$0xff]
    %v2064 = vld [vmem:[#allocation5 + $0x2a0] sm:$0xff]
    %v2065 = vld [vmem:[#allocation5 + $0x2b8] sm:$0xff]
    %v2066 = vld [vmem:[#allocation5 + $0x2d0] sm:$0xff]
    %v2067 = vld [vmem:[#allocation5 + $0x2e8] sm:$0xff]
    %v2068 = vld [vmem:[#allocation5 + $0x300] sm:$0xff]
    %v2069 = vld [vmem:[#allocation5 + $0x318] sm:$0xff]
    %v2070 = vld [vmem:[#allocation5 + $0x330] sm:$0xff]
    %v2071 = vld [vmem:[#allocation5 + $0x348] sm:$0xff]
    %v2072 = vld [vmem:[#allocation5 + $0x360] sm:$0xff]
    %v2073 = vld [vmem:[#allocation5 + $0x378] sm:$0xff]
    %v2074 = vld [vmem:[#allocation5 + $0x390] sm:$0xff]
    %v2075 = vld [vmem:[#allocation5 + $0x3a8] sm:$0xff]
    %v2076 = vld [vmem:[#allocation5 + $0x3c0] sm:$0xff]
    %v2077 = vld [vmem:[#allocation5 + $0x3d8] sm:$0xff]
    %v2078 = vld [vmem:[#allocation5 + $0x3f0] sm:$0xff]
    %v2079 = vld [vmem:[#allocation5 + $0x408] sm:$0xff]
    %v2080 = vld [vmem:[#allocation5 + $0x420] sm:$0xff]
    %v2081 = vld [vmem:[#allocation5 + $0x438] sm:$0xff]
    %v2082 = vld [vmem:[#allocation5 + $0x450] sm:$0xff]
    %v2083 = vld [vmem:[#allocation5 + $0x468] sm:$0xff]
    %v2084 = vld [vmem:[#allocation5 + $0x480] sm:$0xff]
    %v2085 = vld [vmem:[#allocation5 + $0x498] sm:$0xff]
    %v2086 = vld [vmem:[#allocation5 + $0x4b0] sm:$0xff]
    %v2087 = vld [vmem:[#allocation5 + $0x4c8] ss:$0 sm:$0xff]
    %2088 = vmatprep.subr.mxu0 0.0
    %2089 = vmatpush1.msra.mxu0 %v2039
    %2090 = vmatprep.subr.mxu0 0.0
    %2091 = vmatpush1.msra.mxu0 %v2040
    %2092 = vmatprep.subr.mxu0 0.0
    %2093 = vmatpush1.msra.mxu0 %v2041
    %2094 = vmatprep.subr.mxu0 0.0
    %2095 = vmatpush1.msra.mxu0 %v2042
    %2096 = vmatprep.subr.mxu0 0.0
    %2097 = vmatpush1.msra.mxu0 %v2043
    %2098 = vmatprep.subr.mxu0 0.0
    %2099 = vmatpush1.msra.mxu0 %v2044
    %2100 = vmatprep.subr.mxu0 0.0
    %2101 = vmatpush1.msra.mxu0 %v2045
    %2102 = vmatprep.subr.mxu0 0.0
    %2103 = vmatpush1.msra.mxu0 %v2046
    %2104 = vmatprep.subr.mxu0 0.0
    %2105 = vmatpush1.msra.mxu0 %v2047
    %2106 = vmatprep.subr.mxu0 0.0
    %2107 = vmatpush1.msra.mxu0 %v2048
    %2108 = vmatprep.subr.mxu0 0.0
    %2109 = vmatpush1.msra.mxu0 %v2049
    %2110 = vmatprep.subr.mxu0 0.0
    %2111 = vmatpush1.msra.mxu0 %v2050
    %2112 = vmatprep.subr.mxu0 0.0
    %2113 = vmatpush1.msra.mxu0 %v2051
    %2114 = vmatprep.subr.mxu0 0.0
    %2115 = vmatpush1.msra.mxu0 %v2052
    %2116 = vmatprep.subr.mxu0 0.0
    %2117 = vmatpush1.msra.mxu0 %v2053
    %2118 = vmatprep.subr.mxu0 0.0
    %2119 = vmatpush1.msra.mxu0 %v2054
    %2120 = vmatprep.subr.mxu0 0.0
    %2121 = vmatpush1.msra.mxu0 %v2055
    %2122 = vmatprep.subr.mxu0 0.0
    %2123 = vmatpush1.msra.mxu0 %v2056
    %2124 = vmatprep.subr.mxu0 0.0
    %2125 = vmatpush1.msra.mxu0 %v2057
    %2126 = vmatprep.subr.mxu0 0.0
    %2127 = vmatpush1.msra.mxu0 %v2058
    %2128 = vmatprep.subr.mxu0 0.0
    %2129 = vmatpush1.msra.mxu0 %v2059
    %2130 = vmatprep.subr.mxu0 0.0
    %2131 = vmatpush1.msra.mxu0 %v2060
    %2132 = vmatprep.subr.mxu0 0.0
    %2133 = vmatpush1.msra.mxu0 %v2061
    %2134 = vmatprep.subr.mxu0 0.0
    %2135 = vmatpush1.msra.mxu0 %v2062
    %2136 = vmatprep.subr.mxu0 0.0
    %2137 = vmatpush1.msra.mxu0 %v2063
    %2138 = vmatprep.subr.mxu0 0.0
    %2139 = vmatpush1.msra.mxu0 %v2064
    %2140 = vmatprep.subr.mxu0 0.0
    %2141 = vmatpush1.msra.mxu0 %v2065
    %2142 = vmatprep.subr.mxu0 0.0
    %2143 = vmatpush1.msra.mxu0 %v2066
    %2144 = vmatprep.subr.mxu0 0.0
    %2145 = vmatpush1.msra.mxu0 %v2067
    %2146 = vmatprep.subr.mxu0 0.0
    %2147 = vmatpush1.msra.mxu0 %v2068
    %2148 = vmatprep.subr.mxu0 0.0
    %2149 = vmatpush1.msra.mxu0 %v2069
    %2150 = vmatprep.subr.mxu0 0.0
    %2151 = vmatpush1.msra.mxu0 %v2070
    %2152 = vmatprep.mubr.f32.mxu0 %v2037
    %2153 = vmatmul.mubr.f32.gmra.mrb[0].mxu0 %v2036
    %v2154 = vpop.f32.mrb[0].mxu0
    %v2155 = vadd.f32 %v2087, %v2154
    %v2156 = vpop.f32.mrb[0].mxu0
    %2157 = vdwg.mxu0
    %2158 = vmatprep.subr.mxu0 0.0
    %2159 = vmatpush1.msra.mxu0 %v2071
    %2160 = vmatprep.subr.mxu0 0.0
    %2161 = vmatpush1.msra.mxu0 %v2072
    %2162 = vmatprep.subr.mxu0 0.0
    %2163 = vmatpush1.msra.mxu0 %v2073
    %2164 = vmatprep.subr.mxu0 0.0
    %2165 = vmatpush1.msra.mxu0 %v2074
    %2166 = vmatprep.subr.mxu0 0.0
    %2167 = vmatpush1.msra.mxu0 %v2075
    %2168 = vmatprep.subr.mxu0 0.0
    %2169 = vmatpush1.msra.mxu0 %v2076
    %2170 = vmatprep.subr.mxu0 0.0
    %2171 = vmatpush1.msra.mxu0 %v2077
    %2172 = vmatprep.subr.mxu0 0.0
    %2173 = vmatpush1.msra.mxu0 %v2078
    %2174 = vmatprep.subr.mxu0 0.0
    %2175 = vmatpush1.msra.mxu0 %v2079
    %2176 = vmatprep.subr.mxu0 0.0
    %2177 = vmatpush1.msra.mxu0 %v2080
    %2178 = vmatprep.subr.mxu0 0.0
    %2179 = vmatpush1.msra.mxu0 %v2081
    %2180 = vmatprep.subr.mxu0 0.0
    %2181 = vmatpush1.msra.mxu0 %v2082
    %2182 = vmatprep.subr.mxu0 0.0
    %2183 = vmatpush1.msra.mxu0 %v2083
    %2184 = vmatprep.subr.mxu0 0.0
    %2185 = vmatpush1.msra.mxu0 %v2084
    %2186 = vmatprep.subr.mxu0 0.0
    %2187 = vmatpush1.msra.mxu0 %v2085
    %2188 = vmatprep.subr.mxu0 0.0
    %2189 = vmatpush1.msra.mxu0 %v2086
    %2190 = vmatprep.subr.mxu0 0.0
    %2191 = vmatpush1.msra.mxu0 0.0
    %2192 = vmatprep.subr.mxu0 0.0
    %2193 = vmatpush1.msra.mxu0 0.0
    %2194 = vmatprep.subr.mxu0 0.0
    %2195 = vmatpush1.msra.mxu0 0.0
    %2196 = vmatprep.subr.mxu0 0.0
    %2197 = vmatpush1.msra.mxu0 0.0
    %2198 = vmatprep.subr.mxu0 0.0
    %2199 = vmatpush1.msra.mxu0 0.0
    %2200 = vmatprep.subr.mxu0 0.0
    %2201 = vmatpush1.msra.mxu0 0.0
    %2202 = vmatprep.subr.mxu0 0.0
    %2203 = vmatpush1.msra.mxu0 0.0
    %2204 = vmatprep.subr.mxu0 0.0
    %2205 = vmatpush1.msra.mxu0 0.0
    %2206 = vmatprep.subr.mxu0 0.0
    %2207 = vmatpush1.msra.mxu0 0.0
    %2208 = vmatprep.subr.mxu0 0.0
    %2209 = vmatpush1.msra.mxu0 0.0
    %2210 = vmatprep.subr.mxu0 0.0
    %2211 = vmatpush1.msra.mxu0 0.0
    %2212 = vmatprep.subr.mxu0 0.0
    %2213 = vmatpush1.msra.mxu0 0.0
    %2214 = vmatprep.subr.mxu0 0.0
    %2215 = vmatpush1.msra.mxu0 0.0
    %2216 = vmatprep.subr.mxu0 0.0
    %2217 = vmatpush1.msra.mxu0 0.0
    %2218 = vmatprep.subr.mxu0 0.0
    %2219 = vmatpush1.msra.mxu0 0.0
    %2220 = vmatprep.subr.mxu0 0.0
    %2221 = vmatpush1.msra.mxu0 0.0
    %2222 = vmatprep.mubr.f32.mxu0 0.0
    %2223 = vmatmul.mubr.f32.gmra.mrb[0].mxu0 %v2038
    %v2224 = vpop.f32.mrb[0].mxu0
    %v2225 = vadd.f32 %v2155, %v2224
    %v2226 = vpop.f32.mrb[0].mxu0
    %2227 = vdwg.mxu0
    %2228 = vst [vmem:[#allocation7] sm:$0xff] %v2225
    // Predicated region
    $region22: #{tpu_custom_call.1} parent=1 // pred_check
      _
    $region23: #{tpu_custom_call.1} parent=1 // pred_check_branch
      %2230 = sbr.rel (0) target = $region25
    $region24: #{tpu_custom_call.1} parent=1 // pred_region
      %s2232 = ssub.s32 128, 128
      %2233 = vsyncadd [#allocation4], %s2232
      %s2235 = sshll.u32 [#allocation7], 4
      %s2236 = int_to_ptr.vmem [resolvable:$true] %s2235
      %2238 = dma.vmem_to_hbm [thread:$0]  %s2236, 128, %s3, [#allocation4]
    $region25: #{tpu_custom_call.1} parent=1 // pred_fallthru
      _
    // Predicated region
    $region26: #{tpu_custom_call.1} parent=1 // pred_check
      _
    $region27: #{tpu_custom_call.1} parent=1 // pred_check_branch
      %2240 = sbr.rel (0) target = $region29
    $region28: #{tpu_custom_call.1} parent=1 // pred_region
      %2241 = dma.done [#allocation4], 128
    $region29: #{tpu_custom_call.1} parent=1 // pred_fallthru
      _
    %2242 = vsyncpa [#allocation3], 1
    %2243 = vsyncpa [#allocation6], 1
    %2244 = vsyncpa [#allocation4], 1

</llo_original>
